<compile_context>
chip_gen: v5e
topology: v5e:2x2
jax: 0.10.0
libtpu: 0.0.40
codegen_flags: <defaults>
</compile_context>

<pallas_src>
from functools import partial

import jax
import jax.numpy as jnp
from jax.experimental import pallas as pl
from jax.experimental.pallas import tpu as pltpu

EMBEDDING_DIM = 50
HIDDEN = 50
GATE_PITCH = 128   # each LSTM gate padded to its own 128-lane block
KPAD = 128         # padded (lane-dense) output width


def make_kernel(T, B, K, V_pad):
    GP = GATE_PITCH

    def kernel(tok_ref, emb_ref, w_ih_ref, w_hh_ref, b_ref, w_fc_ref, b_fc_ref,
               out_ref):
        # tok_ref  : (T*B, 1)      int32, time-major token ids
        # emb_ref  : (V_pad, E)    bf16 embedding table (VMEM resident)
        # w_ih_ref : (E, 4*128)    bf16, gate-padded columns (order i,f,g,o)
        # w_hh_ref : (128, 4*128)  bf16, rows >= H and padded gate lanes are 0
        # b_ref    : (1, 4*128)    f32 combined bias (b_ih + b_hh), gate-padded
        # w_fc_ref : (128, 128)    bf16, rows >= H and cols >= K are 0
        # b_fc_ref : (1, 128)      f32, cols >= K are 0
        # out_ref  : (B*T, 128)    f32 batch-major padded log-probs

        # ---- fused embedding gather: one-hot @ table on the MXU (exact) ----
        tok = tok_ref[...]                                              # (T*B, 1)
        vocab_iota = jax.lax.broadcasted_iota(jnp.int32, (T * B, V_pad), 1)
        onehot = jnp.where(tok == vocab_iota, 1.0, 0.0).astype(jnp.bfloat16)
        x = jnp.dot(onehot, emb_ref[...],
                    preferred_element_type=jnp.float32)                 # (T*B, E)

        # ---- input projection hoisted out of the recurrence (+ bias) ----
        xp = (jnp.dot(x.astype(jnp.bfloat16), w_ih_ref[...],
                      preferred_element_type=jnp.float32)
              + b_ref[...])                                             # (T*B, 4*GP)
        # Pre-slice per-timestep blocks; independent of h => off the serial path.
        xp_t = [xp[t * B:(t + 1) * B, :] for t in range(T)]

        w_hh = w_hh_ref[...]                                            # (GP, 4*GP)

        h = jnp.zeros((B, GP), jnp.float32)
        c = jnp.zeros((B, GP), jnp.float32)
        h_list = []

        # Fully-unrolled recurrence; only h @ W_hh + elementwise on the serial
        # critical path; gate slices are 128-lane aligned (free vreg selects).
        for t in range(T):
            gates = xp_t[t] + jnp.dot(h.astype(jnp.bfloat16), w_hh,
                                      preferred_element_type=jnp.float32)
            i_g = jax.nn.sigmoid(gates[:, 0 * GP:1 * GP])
            f_g = jax.nn.sigmoid(gates[:, 1 * GP:2 * GP])
            g_g = jnp.tanh(gates[:, 2 * GP:3 * GP])
            o_g = jax.nn.sigmoid(gates[:, 3 * GP:4 * GP])
            c = f_g * c + i_g * g_g
            h = o_g * jnp.tanh(c)
            h_list.append(h)

        # ---- assemble the hidden-state slab batch-major (no VMEM scratch) ----
        hs_bm = jnp.concatenate(
            [h_list[t][bb:bb + 1, :] for bb in range(B) for t in range(T)],
            axis=0)                                                     # (B*T, GP)

        # ---- head + log_softmax, lane-dense padded output ----
        logits = (jnp.dot(hs_bm.astype(jnp.bfloat16), w_fc_ref[...],
                          preferred_element_type=jnp.float32)
                  + b_fc_ref[...])                                      # (B*T, KPAD)
        col = jax.lax.broadcasted_iota(jnp.int32, (B * T, KPAD), 1)
        logits = jnp.where(col < K, logits, jnp.float32(-1e30))         # kill pad lanes
        m = jnp.max(logits, axis=1, keepdims=True)
        lse = m + jnp.log(jnp.sum(jnp.exp(logits - m), axis=1, keepdims=True))
        out_ref[...] = logits - lse

    return kernel


def init_params(key, vocab_size, number_of_tags):
    """Logical (unpadded, f32) parameters matching the PyTorch module."""
    E, H, K = EMBEDDING_DIM, HIDDEN, number_of_tags
    k_emb, k_wih, k_whh, k_bih, k_bhh, k_wfc, k_bfc = jax.random.split(key, 7)
    bound = 1.0 / jnp.sqrt(H)
    return {
        # nn.Embedding init ~ N(0, 1)
        "embedding": jax.random.normal(k_emb, (vocab_size, E), jnp.float32),
        # LSTM weights, fused across gates (i,f,g,o) and pre-transposed.
        "w_ih": jax.random.uniform(k_wih, (E, 4 * H), jnp.float32, -bound, bound),
        "w_hh": jax.random.uniform(k_whh, (H, 4 * H), jnp.float32, -bound, bound),
        "b": (jax.random.uniform(k_bih, (1, 4 * H), jnp.float32, -bound, bound)
              + jax.random.uniform(k_bhh, (1, 4 * H), jnp.float32, -bound, bound)),
        "w_fc": jax.random.uniform(k_wfc, (H, K), jnp.float32, -bound, bound),
        "b_fc": jax.random.uniform(k_bfc, (1, K), jnp.float32, -bound, bound),
    }


def pack_params(params):
    """One-time repack into the kernel layout (gate/lane padded, bf16 MXU operands)."""
    E, H = EMBEDDING_DIM, HIDDEN
    K = params["b_fc"].shape[-1]
    V = params["embedding"].shape[0]
    V_pad = -(-V // 8) * 8
    GP = GATE_PITCH

    def pad_gates(w, rows):
        out = jnp.zeros((rows, 4 * GP), jnp.float32)
        for g in range(4):
            out = out.at[:w.shape[0], g * GP:g * GP + H].set(w[:, g * H:(g + 1) * H])
        return out

    emb_p = jnp.zeros((V_pad, E), jnp.float32).at[:V].set(params["embedding"])
    return {
        "emb": emb_p.astype(jnp.bfloat16),
        "w_ih": pad_gates(params["w_ih"], E).astype(jnp.bfloat16),
        "w_hh": pad_gates(params["w_hh"], GP).astype(jnp.bfloat16),
        "b": pad_gates(params["b"], 1),                                   # f32
        "w_fc": jnp.zeros((GP, KPAD), jnp.float32)
                   .at[:H, :K].set(params["w_fc"]).astype(jnp.bfloat16),
        "b_fc": jnp.zeros((1, KPAD), jnp.float32).at[0, :K].set(params["b_fc"][0]),
    }


@partial(jax.jit, static_argnames=("num_tags",))
def net_forward(tokens, kparams, num_tags):
    """tokens: int32 (B, T) -> log-probs (B*T, K), matching the PyTorch forward."""
    B, T = tokens.shape
    K = num_tags
    V_pad = kparams["emb"].shape[0]

    # Time-major token column (tiny int op; replaces the float gather+transpose).
    tok_tm = jnp.transpose(tokens).reshape(T * B, 1).astype(jnp.int32)

    kernel = make_kernel(T=T, B=B, K=K, V_pad=V_pad)
    out_pad = pl.pallas_call(
        kernel,
        out_shape=jax.ShapeDtypeStruct((B * T, KPAD), jnp.float32),
        in_specs=[pl.BlockSpec(memory_space=pltpu.MemorySpace.VMEM)] * 7,
        out_specs=pl.BlockSpec(memory_space=pltpu.MemorySpace.VMEM),
    )(tok_tm, kparams["emb"], kparams["w_ih"], kparams["w_hh"], kparams["b"],
      kparams["w_fc"], kparams["b_fc"])

    # Kernel output is already batch-major (row = b*T + t); just drop pad lanes.
    return out_pad[:, :K]


def net_forward_reference(tokens, params):
    """Pure-JAX f32 reference (same math as the PyTorch module)."""
    B, T = tokens.shape
    H = HIDDEN
    x = params["embedding"][tokens].astype(jnp.float32)          # (B, T, E)
    h = jnp.zeros((B, H), jnp.float32)
    c = jnp.zeros((B, H), jnp.float32)
    outs = []
    for t in range(T):
        g = x[:, t, :] @ params["w_ih"] + h @ params["w_hh"] + params["b"]
        i_g = jax.nn.sigmoid(g[:, 0 * H:1 * H])
        f_g = jax.nn.sigmoid(g[:, 1 * H:2 * H])
        g_g = jnp.tanh(g[:, 2 * H:3 * H])
        o_g = jax.nn.sigmoid(g[:, 3 * H:4 * H])
        c = f_g * c + i_g * g_g
        h = o_g * jnp.tanh(c)
        logits = h @ params["w_fc"] + params["b_fc"]
        outs.append(jax.nn.log_softmax(logits, axis=1))
    out = jnp.stack(outs, axis=1)                                # (B, T, K)
    return out.reshape(B * T, -1)


if __name__ == "__main__":
    vocab_size = 30
    number_of_tags = 5
    B, T = 2, 8

    key = jax.random.PRNGKey(0)
    k_params, k_tok = jax.random.split(key)
    params = init_params(k_params, vocab_size, number_of_tags)
    kparams = pack_params(params)      # one-time layout prep, outside the hot path
    tokens = jax.random.randint(k_tok, (B, T), 0, vocab_size, dtype=jnp.int32)

    out = net_forward(tokens, kparams, number_of_tags)
    out = jax.block_until_ready(out)

    ref = net_forward_reference(tokens, params)
    assert out.shape == (B * T, number_of_tags)
    # bf16 MXU operands vs the f32 reference accumulate ~1e-3 error over T steps;
    # 2e-2 still catches any structural/gate-order/layout bug by a wide margin.
    assert jnp.allclose(out, ref, rtol=2e-2, atol=2e-2), \
        float(jnp.max(jnp.abs(out - ref)))

    print("KERNEL_OK")
</pallas_src>

<mosaic_0001>
module attributes {stable_mosaic.version = 11 : i64} {
  func.func @kernel(%arg0: memref<16x1xi32, #tpu.memory_space<vmem>>, %arg1: memref<32x50xbf16, #tpu.memory_space<vmem>>, %arg2: memref<50x512xbf16, #tpu.memory_space<vmem>>, %arg3: memref<128x512xbf16, #tpu.memory_space<vmem>>, %arg4: memref<1x512xf32, #tpu.memory_space<vmem>>, %arg5: memref<128x128xbf16, #tpu.memory_space<vmem>>, %arg6: memref<1x128xf32, #tpu.memory_space<vmem>>, %arg7: memref<16x128xf32, #tpu.memory_space<vmem>>) attributes {dimension_semantics = [], scalar_prefetch = 0 : i64, scratch_operands = 0 : i64, tpu.core_type = #tpu.core_type<tc>} {
    %c0 = arith.constant 0 : index
    %c0_0 = arith.constant 0 : index
    %0 = vector.load %arg0[%c0, %c0_0] : memref<16x1xi32, #tpu.memory_space<vmem>>, vector<16x1xi32>
    %1 = tpu.iota {dimensions = array<i32: 1>} : vector<16x32xi32>
    %2 = vector.broadcast %0 : vector<16x1xi32> to vector<16x32xi32>
    %3 = arith.cmpi eq, %2, %1 : vector<16x32xi32>
    %cst = arith.constant 1.000000e+00 : f32
    %cst_1 = arith.constant 0.000000e+00 : f32
    %4 = vector.broadcast %cst : f32 to vector<16x32xf32>
    %5 = vector.broadcast %cst_1 : f32 to vector<16x32xf32>
    %6 = arith.select %3, %4, %5 : vector<16x32xi1>, vector<16x32xf32>
    %7 = arith.truncf %6 : vector<16x32xf32> to vector<16x32xbf16>
    %c0_2 = arith.constant 0 : index
    %c0_3 = arith.constant 0 : index
    %8 = vector.load %arg1[%c0_2, %c0_3] : memref<32x50xbf16, #tpu.memory_space<vmem>>, vector<32x50xbf16>
    %cst_4 = arith.constant dense<0.000000e+00> : vector<16x50xf32>
    %9 = tpu.matmul %7, %8, %cst_4 {dimension_numbers = #tpu.dot_dimension_numbers<[1], [0], [0], [1], [0, 0, 1, 1], [], []>} : vector<16x32xbf16>, vector<32x50xbf16>, vector<16x50xf32> -> vector<16x50xf32>
    %10 = arith.truncf %9 : vector<16x50xf32> to vector<16x50xbf16>
    %c0_5 = arith.constant 0 : index
    %c0_6 = arith.constant 0 : index
    %11 = vector.load %arg2[%c0_5, %c0_6] : memref<50x512xbf16, #tpu.memory_space<vmem>>, vector<50x512xbf16>
    %cst_7 = arith.constant dense<0.000000e+00> : vector<16x512xf32>
    %12 = tpu.matmul %10, %11, %cst_7 {dimension_numbers = #tpu.dot_dimension_numbers<[1], [0], [0], [1], [0, 0, 1, 1], [], []>} : vector<16x50xbf16>, vector<50x512xbf16>, vector<16x512xf32> -> vector<16x512xf32>
    %c0_8 = arith.constant 0 : index
    %c0_9 = arith.constant 0 : index
    %13 = vector.load %arg4[%c0_8, %c0_9] : memref<1x512xf32, #tpu.memory_space<vmem>>, vector<1x512xf32>
    %14 = vector.broadcast %13 : vector<1x512xf32> to vector<16x512xf32>
    %15 = arith.addf %12, %14 : vector<16x512xf32>
    %16 = vector.extract_strided_slice %15 {offsets = [0, 0], sizes = [2, 512], strides = [1, 1]} : vector<16x512xf32> to vector<2x512xf32>
    %17 = vector.extract_strided_slice %15 {offsets = [2, 0], sizes = [2, 512], strides = [1, 1]} : vector<16x512xf32> to vector<2x512xf32>
    %18 = vector.extract_strided_slice %15 {offsets = [4, 0], sizes = [2, 512], strides = [1, 1]} : vector<16x512xf32> to vector<2x512xf32>
    %19 = vector.extract_strided_slice %15 {offsets = [6, 0], sizes = [2, 512], strides = [1, 1]} : vector<16x512xf32> to vector<2x512xf32>
    %20 = vector.extract_strided_slice %15 {offsets = [8, 0], sizes = [2, 512], strides = [1, 1]} : vector<16x512xf32> to vector<2x512xf32>
    %21 = vector.extract_strided_slice %15 {offsets = [10, 0], sizes = [2, 512], strides = [1, 1]} : vector<16x512xf32> to vector<2x512xf32>
    %22 = vector.extract_strided_slice %15 {offsets = [12, 0], sizes = [2, 512], strides = [1, 1]} : vector<16x512xf32> to vector<2x512xf32>
    %23 = vector.extract_strided_slice %15 {offsets = [14, 0], sizes = [2, 512], strides = [1, 1]} : vector<16x512xf32> to vector<2x512xf32>
    %c0_10 = arith.constant 0 : index
    %c0_11 = arith.constant 0 : index
    %24 = vector.load %arg3[%c0_10, %c0_11] : memref<128x512xbf16, #tpu.memory_space<vmem>>, vector<128x512xbf16>
    %cst_12 = arith.constant 0.000000e+00 : f32
    %25 = vector.broadcast %cst_12 : f32 to vector<2x128xf32>
    %cst_13 = arith.constant 0.000000e+00 : f32
    %26 = vector.broadcast %cst_13 : f32 to vector<2x128xf32>
    %27 = arith.truncf %25 : vector<2x128xf32> to vector<2x128xbf16>
    %cst_14 = arith.constant dense<0.000000e+00> : vector<2x512xf32>
    %28 = tpu.matmul %27, %24, %cst_14 {dimension_numbers = #tpu.dot_dimension_numbers<[1], [0], [0], [1], [0, 0, 1, 1], [], []>} : vector<2x128xbf16>, vector<128x512xbf16>, vector<2x512xf32> -> vector<2x512xf32>
    %29 = arith.addf %16, %28 : vector<2x512xf32>
    %30 = vector.extract_strided_slice %29 {offsets = [0, 0], sizes = [2, 128], strides = [1, 1]} : vector<2x512xf32> to vector<2x128xf32>
    %31 = arith.negf %30 : vector<2x128xf32>
    %32 = math.exp %31 : vector<2x128xf32>
    %cst_15 = arith.constant 1.000000e+00 : f32
    %33 = vector.broadcast %cst_15 : f32 to vector<2x128xf32>
    %34 = arith.addf %33, %32 : vector<2x128xf32>
    %35 = arith.divf %33, %34 : vector<2x128xf32>
    %36 = vector.extract_strided_slice %29 {offsets = [0, 128], sizes = [2, 128], strides = [1, 1]} : vector<2x512xf32> to vector<2x128xf32>
    %37 = arith.negf %36 : vector<2x128xf32>
    %38 = math.exp %37 : vector<2x128xf32>
    %cst_16 = arith.constant 1.000000e+00 : f32
    %39 = vector.broadcast %cst_16 : f32 to vector<2x128xf32>
    %40 = arith.addf %39, %38 : vector<2x128xf32>
    %41 = arith.divf %39, %40 : vector<2x128xf32>
    %42 = vector.extract_strided_slice %29 {offsets = [0, 256], sizes = [2, 128], strides = [1, 1]} : vector<2x512xf32> to vector<2x128xf32>
    %43 = math.tanh %42 : vector<2x128xf32>
    %44 = vector.extract_strided_slice %29 {offsets = [0, 384], sizes = [2, 128], strides = [1, 1]} : vector<2x512xf32> to vector<2x128xf32>
    %45 = arith.negf %44 : vector<2x128xf32>
    %46 = math.exp %45 : vector<2x128xf32>
    %cst_17 = arith.constant 1.000000e+00 : f32
    %47 = vector.broadcast %cst_17 : f32 to vector<2x128xf32>
    %48 = arith.addf %47, %46 : vector<2x128xf32>
    %49 = arith.divf %47, %48 : vector<2x128xf32>
    %50 = arith.mulf %41, %26 : vector<2x128xf32>
    %51 = arith.mulf %35, %43 : vector<2x128xf32>
    %52 = arith.addf %50, %51 : vector<2x128xf32>
    %53 = math.tanh %52 : vector<2x128xf32>
    %54 = arith.mulf %49, %53 : vector<2x128xf32>
    %55 = arith.truncf %54 : vector<2x128xf32> to vector<2x128xbf16>
    %cst_18 = arith.constant dense<0.000000e+00> : vector<2x512xf32>
    %56 = tpu.matmul %55, %24, %cst_18 {dimension_numbers = #tpu.dot_dimension_numbers<[1], [0], [0], [1], [0, 0, 1, 1], [], []>} : vector<2x128xbf16>, vector<128x512xbf16>, vector<2x512xf32> -> vector<2x512xf32>
    %57 = arith.addf %17, %56 : vector<2x512xf32>
    %58 = vector.extract_strided_slice %57 {offsets = [0, 0], sizes = [2, 128], strides = [1, 1]} : vector<2x512xf32> to vector<2x128xf32>
    %59 = arith.negf %58 : vector<2x128xf32>
    %60 = math.exp %59 : vector<2x128xf32>
    %cst_19 = arith.constant 1.000000e+00 : f32
    %61 = vector.broadcast %cst_19 : f32 to vector<2x128xf32>
    %62 = arith.addf %61, %60 : vector<2x128xf32>
    %63 = arith.divf %61, %62 : vector<2x128xf32>
    %64 = vector.extract_strided_slice %57 {offsets = [0, 128], sizes = [2, 128], strides = [1, 1]} : vector<2x512xf32> to vector<2x128xf32>
    %65 = arith.negf %64 : vector<2x128xf32>
    %66 = math.exp %65 : vector<2x128xf32>
    %cst_20 = arith.constant 1.000000e+00 : f32
    %67 = vector.broadcast %cst_20 : f32 to vector<2x128xf32>
    %68 = arith.addf %67, %66 : vector<2x128xf32>
    %69 = arith.divf %67, %68 : vector<2x128xf32>
    %70 = vector.extract_strided_slice %57 {offsets = [0, 256], sizes = [2, 128], strides = [1, 1]} : vector<2x512xf32> to vector<2x128xf32>
    %71 = math.tanh %70 : vector<2x128xf32>
    %72 = vector.extract_strided_slice %57 {offsets = [0, 384], sizes = [2, 128], strides = [1, 1]} : vector<2x512xf32> to vector<2x128xf32>
    %73 = arith.negf %72 : vector<2x128xf32>
    %74 = math.exp %73 : vector<2x128xf32>
    %cst_21 = arith.constant 1.000000e+00 : f32
    %75 = vector.broadcast %cst_21 : f32 to vector<2x128xf32>
    %76 = arith.addf %75, %74 : vector<2x128xf32>
    %77 = arith.divf %75, %76 : vector<2x128xf32>
    %78 = arith.mulf %69, %52 : vector<2x128xf32>
    %79 = arith.mulf %63, %71 : vector<2x128xf32>
    %80 = arith.addf %78, %79 : vector<2x128xf32>
    %81 = math.tanh %80 : vector<2x128xf32>
    %82 = arith.mulf %77, %81 : vector<2x128xf32>
    %83 = arith.truncf %82 : vector<2x128xf32> to vector<2x128xbf16>
    %cst_22 = arith.constant dense<0.000000e+00> : vector<2x512xf32>
    %84 = tpu.matmul %83, %24, %cst_22 {dimension_numbers = #tpu.dot_dimension_numbers<[1], [0], [0], [1], [0, 0, 1, 1], [], []>} : vector<2x128xbf16>, vector<128x512xbf16>, vector<2x512xf32> -> vector<2x512xf32>
    %85 = arith.addf %18, %84 : vector<2x512xf32>
    %86 = vector.extract_strided_slice %85 {offsets = [0, 0], sizes = [2, 128], strides = [1, 1]} : vector<2x512xf32> to vector<2x128xf32>
    %87 = arith.negf %86 : vector<2x128xf32>
    %88 = math.exp %87 : vector<2x128xf32>
    %cst_23 = arith.constant 1.000000e+00 : f32
    %89 = vector.broadcast %cst_23 : f32 to vector<2x128xf32>
    %90 = arith.addf %89, %88 : vector<2x128xf32>
    %91 = arith.divf %89, %90 : vector<2x128xf32>
    %92 = vector.extract_strided_slice %85 {offsets = [0, 128], sizes = [2, 128], strides = [1, 1]} : vector<2x512xf32> to vector<2x128xf32>
    %93 = arith.negf %92 : vector<2x128xf32>
    %94 = math.exp %93 : vector<2x128xf32>
    %cst_24 = arith.constant 1.000000e+00 : f32
    %95 = vector.broadcast %cst_24 : f32 to vector<2x128xf32>
    %96 = arith.addf %95, %94 : vector<2x128xf32>
    %97 = arith.divf %95, %96 : vector<2x128xf32>
    %98 = vector.extract_strided_slice %85 {offsets = [0, 256], sizes = [2, 128], strides = [1, 1]} : vector<2x512xf32> to vector<2x128xf32>
    %99 = math.tanh %98 : vector<2x128xf32>
    %100 = vector.extract_strided_slice %85 {offsets = [0, 384], sizes = [2, 128], strides = [1, 1]} : vector<2x512xf32> to vector<2x128xf32>
    %101 = arith.negf %100 : vector<2x128xf32>
    %102 = math.exp %101 : vector<2x128xf32>
    %cst_25 = arith.constant 1.000000e+00 : f32
    %103 = vector.broadcast %cst_25 : f32 to vector<2x128xf32>
    %104 = arith.addf %103, %102 : vector<2x128xf32>
    %105 = arith.divf %103, %104 : vector<2x128xf32>
    %106 = arith.mulf %97, %80 : vector<2x128xf32>
    %107 = arith.mulf %91, %99 : vector<2x128xf32>
    %108 = arith.addf %106, %107 : vector<2x128xf32>
    %109 = math.tanh %108 : vector<2x128xf32>
    %110 = arith.mulf %105, %109 : vector<2x128xf32>
    %111 = arith.truncf %110 : vector<2x128xf32> to vector<2x128xbf16>
    %cst_26 = arith.constant dense<0.000000e+00> : vector<2x512xf32>
    %112 = tpu.matmul %111, %24, %cst_26 {dimension_numbers = #tpu.dot_dimension_numbers<[1], [0], [0], [1], [0, 0, 1, 1], [], []>} : vector<2x128xbf16>, vector<128x512xbf16>, vector<2x512xf32> -> vector<2x512xf32>
    %113 = arith.addf %19, %112 : vector<2x512xf32>
    %114 = vector.extract_strided_slice %113 {offsets = [0, 0], sizes = [2, 128], strides = [1, 1]} : vector<2x512xf32> to vector<2x128xf32>
    %115 = arith.negf %114 : vector<2x128xf32>
    %116 = math.exp %115 : vector<2x128xf32>
    %cst_27 = arith.constant 1.000000e+00 : f32
    %117 = vector.broadcast %cst_27 : f32 to vector<2x128xf32>
    %118 = arith.addf %117, %116 : vector<2x128xf32>
    %119 = arith.divf %117, %118 : vector<2x128xf32>
    %120 = vector.extract_strided_slice %113 {offsets = [0, 128], sizes = [2, 128], strides = [1, 1]} : vector<2x512xf32> to vector<2x128xf32>
    %121 = arith.negf %120 : vector<2x128xf32>
    %122 = math.exp %121 : vector<2x128xf32>
    %cst_28 = arith.constant 1.000000e+00 : f32
    %123 = vector.broadcast %cst_28 : f32 to vector<2x128xf32>
    %124 = arith.addf %123, %122 : vector<2x128xf32>
    %125 = arith.divf %123, %124 : vector<2x128xf32>
    %126 = vector.extract_strided_slice %113 {offsets = [0, 256], sizes = [2, 128], strides = [1, 1]} : vector<2x512xf32> to vector<2x128xf32>
    %127 = math.tanh %126 : vector<2x128xf32>
    %128 = vector.extract_strided_slice %113 {offsets = [0, 384], sizes = [2, 128], strides = [1, 1]} : vector<2x512xf32> to vector<2x128xf32>
    %129 = arith.negf %128 : vector<2x128xf32>
    %130 = math.exp %129 : vector<2x128xf32>
    %cst_29 = arith.constant 1.000000e+00 : f32
    %131 = vector.broadcast %cst_29 : f32 to vector<2x128xf32>
    %132 = arith.addf %131, %130 : vector<2x128xf32>
    %133 = arith.divf %131, %132 : vector<2x128xf32>
    %134 = arith.mulf %125, %108 : vector<2x128xf32>
    %135 = arith.mulf %119, %127 : vector<2x128xf32>
    %136 = arith.addf %134, %135 : vector<2x128xf32>
    %137 = math.tanh %136 : vector<2x128xf32>
    %138 = arith.mulf %133, %137 : vector<2x128xf32>
    %139 = arith.truncf %138 : vector<2x128xf32> to vector<2x128xbf16>
    %cst_30 = arith.constant dense<0.000000e+00> : vector<2x512xf32>
    %140 = tpu.matmul %139, %24, %cst_30 {dimension_numbers = #tpu.dot_dimension_numbers<[1], [0], [0], [1], [0, 0, 1, 1], [], []>} : vector<2x128xbf16>, vector<128x512xbf16>, vector<2x512xf32> -> vector<2x512xf32>
    %141 = arith.addf %20, %140 : vector<2x512xf32>
    %142 = vector.extract_strided_slice %141 {offsets = [0, 0], sizes = [2, 128], strides = [1, 1]} : vector<2x512xf32> to vector<2x128xf32>
    %143 = arith.negf %142 : vector<2x128xf32>
    %144 = math.exp %143 : vector<2x128xf32>
    %cst_31 = arith.constant 1.000000e+00 : f32
    %145 = vector.broadcast %cst_31 : f32 to vector<2x128xf32>
    %146 = arith.addf %145, %144 : vector<2x128xf32>
    %147 = arith.divf %145, %146 : vector<2x128xf32>
    %148 = vector.extract_strided_slice %141 {offsets = [0, 128], sizes = [2, 128], strides = [1, 1]} : vector<2x512xf32> to vector<2x128xf32>
    %149 = arith.negf %148 : vector<2x128xf32>
    %150 = math.exp %149 : vector<2x128xf32>
    %cst_32 = arith.constant 1.000000e+00 : f32
    %151 = vector.broadcast %cst_32 : f32 to vector<2x128xf32>
    %152 = arith.addf %151, %150 : vector<2x128xf32>
    %153 = arith.divf %151, %152 : vector<2x128xf32>
    %154 = vector.extract_strided_slice %141 {offsets = [0, 256], sizes = [2, 128], strides = [1, 1]} : vector<2x512xf32> to vector<2x128xf32>
    %155 = math.tanh %154 : vector<2x128xf32>
    %156 = vector.extract_strided_slice %141 {offsets = [0, 384], sizes = [2, 128], strides = [1, 1]} : vector<2x512xf32> to vector<2x128xf32>
    %157 = arith.negf %156 : vector<2x128xf32>
    %158 = math.exp %157 : vector<2x128xf32>
    %cst_33 = arith.constant 1.000000e+00 : f32
    %159 = vector.broadcast %cst_33 : f32 to vector<2x128xf32>
    %160 = arith.addf %159, %158 : vector<2x128xf32>
    %161 = arith.divf %159, %160 : vector<2x128xf32>
    %162 = arith.mulf %153, %136 : vector<2x128xf32>
    %163 = arith.mulf %147, %155 : vector<2x128xf32>
    %164 = arith.addf %162, %163 : vector<2x128xf32>
    %165 = math.tanh %164 : vector<2x128xf32>
    %166 = arith.mulf %161, %165 : vector<2x128xf32>
    %167 = arith.truncf %166 : vector<2x128xf32> to vector<2x128xbf16>
    %cst_34 = arith.constant dense<0.000000e+00> : vector<2x512xf32>
    %168 = tpu.matmul %167, %24, %cst_34 {dimension_numbers = #tpu.dot_dimension_numbers<[1], [0], [0], [1], [0, 0, 1, 1], [], []>} : vector<2x128xbf16>, vector<128x512xbf16>, vector<2x512xf32> -> vector<2x512xf32>
    %169 = arith.addf %21, %168 : vector<2x512xf32>
    %170 = vector.extract_strided_slice %169 {offsets = [0, 0], sizes = [2, 128], strides = [1, 1]} : vector<2x512xf32> to vector<2x128xf32>
    %171 = arith.negf %170 : vector<2x128xf32>
    %172 = math.exp %171 : vector<2x128xf32>
    %cst_35 = arith.constant 1.000000e+00 : f32
    %173 = vector.broadcast %cst_35 : f32 to vector<2x128xf32>
    %174 = arith.addf %173, %172 : vector<2x128xf32>
    %175 = arith.divf %173, %174 : vector<2x128xf32>
    %176 = vector.extract_strided_slice %169 {offsets = [0, 128], sizes = [2, 128], strides = [1, 1]} : vector<2x512xf32> to vector<2x128xf32>
    %177 = arith.negf %176 : vector<2x128xf32>
    %178 = math.exp %177 : vector<2x128xf32>
    %cst_36 = arith.constant 1.000000e+00 : f32
    %179 = vector.broadcast %cst_36 : f32 to vector<2x128xf32>
    %180 = arith.addf %179, %178 : vector<2x128xf32>
    %181 = arith.divf %179, %180 : vector<2x128xf32>
    %182 = vector.extract_strided_slice %169 {offsets = [0, 256], sizes = [2, 128], strides = [1, 1]} : vector<2x512xf32> to vector<2x128xf32>
    %183 = math.tanh %182 : vector<2x128xf32>
    %184 = vector.extract_strided_slice %169 {offsets = [0, 384], sizes = [2, 128], strides = [1, 1]} : vector<2x512xf32> to vector<2x128xf32>
    %185 = arith.negf %184 : vector<2x128xf32>
    %186 = math.exp %185 : vector<2x128xf32>
    %cst_37 = arith.constant 1.000000e+00 : f32
    %187 = vector.broadcast %cst_37 : f32 to vector<2x128xf32>
    %188 = arith.addf %187, %186 : vector<2x128xf32>
    %189 = arith.divf %187, %188 : vector<2x128xf32>
    %190 = arith.mulf %181, %164 : vector<2x128xf32>
    %191 = arith.mulf %175, %183 : vector<2x128xf32>
    %192 = arith.addf %190, %191 : vector<2x128xf32>
    %193 = math.tanh %192 : vector<2x128xf32>
    %194 = arith.mulf %189, %193 : vector<2x128xf32>
    %195 = arith.truncf %194 : vector<2x128xf32> to vector<2x128xbf16>
    %cst_38 = arith.constant dense<0.000000e+00> : vector<2x512xf32>
    %196 = tpu.matmul %195, %24, %cst_38 {dimension_numbers = #tpu.dot_dimension_numbers<[1], [0], [0], [1], [0, 0, 1, 1], [], []>} : vector<2x128xbf16>, vector<128x512xbf16>, vector<2x512xf32> -> vector<2x512xf32>
    %197 = arith.addf %22, %196 : vector<2x512xf32>
    %198 = vector.extract_strided_slice %197 {offsets = [0, 0], sizes = [2, 128], strides = [1, 1]} : vector<2x512xf32> to vector<2x128xf32>
    %199 = arith.negf %198 : vector<2x128xf32>
    %200 = math.exp %199 : vector<2x128xf32>
    %cst_39 = arith.constant 1.000000e+00 : f32
    %201 = vector.broadcast %cst_39 : f32 to vector<2x128xf32>
    %202 = arith.addf %201, %200 : vector<2x128xf32>
    %203 = arith.divf %201, %202 : vector<2x128xf32>
    %204 = vector.extract_strided_slice %197 {offsets = [0, 128], sizes = [2, 128], strides = [1, 1]} : vector<2x512xf32> to vector<2x128xf32>
    %205 = arith.negf %204 : vector<2x128xf32>
    %206 = math.exp %205 : vector<2x128xf32>
    %cst_40 = arith.constant 1.000000e+00 : f32
    %207 = vector.broadcast %cst_40 : f32 to vector<2x128xf32>
    %208 = arith.addf %207, %206 : vector<2x128xf32>
    %209 = arith.divf %207, %208 : vector<2x128xf32>
    %210 = vector.extract_strided_slice %197 {offsets = [0, 256], sizes = [2, 128], strides = [1, 1]} : vector<2x512xf32> to vector<2x128xf32>
    %211 = math.tanh %210 : vector<2x128xf32>
    %212 = vector.extract_strided_slice %197 {offsets = [0, 384], sizes = [2, 128], strides = [1, 1]} : vector<2x512xf32> to vector<2x128xf32>
    %213 = arith.negf %212 : vector<2x128xf32>
    %214 = math.exp %213 : vector<2x128xf32>
    %cst_41 = arith.constant 1.000000e+00 : f32
    %215 = vector.broadcast %cst_41 : f32 to vector<2x128xf32>
    %216 = arith.addf %215, %214 : vector<2x128xf32>
    %217 = arith.divf %215, %216 : vector<2x128xf32>
    %218 = arith.mulf %209, %192 : vector<2x128xf32>
    %219 = arith.mulf %203, %211 : vector<2x128xf32>
    %220 = arith.addf %218, %219 : vector<2x128xf32>
    %221 = math.tanh %220 : vector<2x128xf32>
    %222 = arith.mulf %217, %221 : vector<2x128xf32>
    %223 = arith.truncf %222 : vector<2x128xf32> to vector<2x128xbf16>
    %cst_42 = arith.constant dense<0.000000e+00> : vector<2x512xf32>
    %224 = tpu.matmul %223, %24, %cst_42 {dimension_numbers = #tpu.dot_dimension_numbers<[1], [0], [0], [1], [0, 0, 1, 1], [], []>} : vector<2x128xbf16>, vector<128x512xbf16>, vector<2x512xf32> -> vector<2x512xf32>
    %225 = arith.addf %23, %224 : vector<2x512xf32>
    %226 = vector.extract_strided_slice %225 {offsets = [0, 0], sizes = [2, 128], strides = [1, 1]} : vector<2x512xf32> to vector<2x128xf32>
    %227 = arith.negf %226 : vector<2x128xf32>
    %228 = math.exp %227 : vector<2x128xf32>
    %cst_43 = arith.constant 1.000000e+00 : f32
    %229 = vector.broadcast %cst_43 : f32 to vector<2x128xf32>
    %230 = arith.addf %229, %228 : vector<2x128xf32>
    %231 = arith.divf %229, %230 : vector<2x128xf32>
    %232 = vector.extract_strided_slice %225 {offsets = [0, 128], sizes = [2, 128], strides = [1, 1]} : vector<2x512xf32> to vector<2x128xf32>
    %233 = arith.negf %232 : vector<2x128xf32>
    %234 = math.exp %233 : vector<2x128xf32>
    %cst_44 = arith.constant 1.000000e+00 : f32
    %235 = vector.broadcast %cst_44 : f32 to vector<2x128xf32>
    %236 = arith.addf %235, %234 : vector<2x128xf32>
    %237 = arith.divf %235, %236 : vector<2x128xf32>
    %238 = vector.extract_strided_slice %225 {offsets = [0, 256], sizes = [2, 128], strides = [1, 1]} : vector<2x512xf32> to vector<2x128xf32>
    %239 = math.tanh %238 : vector<2x128xf32>
    %240 = vector.extract_strided_slice %225 {offsets = [0, 384], sizes = [2, 128], strides = [1, 1]} : vector<2x512xf32> to vector<2x128xf32>
    %241 = arith.negf %240 : vector<2x128xf32>
    %242 = math.exp %241 : vector<2x128xf32>
    %cst_45 = arith.constant 1.000000e+00 : f32
    %243 = vector.broadcast %cst_45 : f32 to vector<2x128xf32>
    %244 = arith.addf %243, %242 : vector<2x128xf32>
    %245 = arith.divf %243, %244 : vector<2x128xf32>
    %246 = arith.mulf %237, %220 : vector<2x128xf32>
    %247 = arith.mulf %231, %239 : vector<2x128xf32>
    %248 = arith.addf %246, %247 : vector<2x128xf32>
    %249 = math.tanh %248 : vector<2x128xf32>
    %250 = arith.mulf %245, %249 : vector<2x128xf32>
    %251 = vector.extract_strided_slice %54 {offsets = [0, 0], sizes = [1, 128], strides = [1, 1]} : vector<2x128xf32> to vector<1x128xf32>
    %252 = vector.extract_strided_slice %82 {offsets = [0, 0], sizes = [1, 128], strides = [1, 1]} : vector<2x128xf32> to vector<1x128xf32>
    %253 = vector.extract_strided_slice %110 {offsets = [0, 0], sizes = [1, 128], strides = [1, 1]} : vector<2x128xf32> to vector<1x128xf32>
    %254 = vector.extract_strided_slice %138 {offsets = [0, 0], sizes = [1, 128], strides = [1, 1]} : vector<2x128xf32> to vector<1x128xf32>
    %255 = vector.extract_strided_slice %166 {offsets = [0, 0], sizes = [1, 128], strides = [1, 1]} : vector<2x128xf32> to vector<1x128xf32>
    %256 = vector.extract_strided_slice %194 {offsets = [0, 0], sizes = [1, 128], strides = [1, 1]} : vector<2x128xf32> to vector<1x128xf32>
    %257 = vector.extract_strided_slice %222 {offsets = [0, 0], sizes = [1, 128], strides = [1, 1]} : vector<2x128xf32> to vector<1x128xf32>
    %258 = vector.extract_strided_slice %250 {offsets = [0, 0], sizes = [1, 128], strides = [1, 1]} : vector<2x128xf32> to vector<1x128xf32>
    %259 = vector.extract_strided_slice %54 {offsets = [1, 0], sizes = [1, 128], strides = [1, 1]} : vector<2x128xf32> to vector<1x128xf32>
    %260 = vector.extract_strided_slice %82 {offsets = [1, 0], sizes = [1, 128], strides = [1, 1]} : vector<2x128xf32> to vector<1x128xf32>
    %261 = vector.extract_strided_slice %110 {offsets = [1, 0], sizes = [1, 128], strides = [1, 1]} : vector<2x128xf32> to vector<1x128xf32>
    %262 = vector.extract_strided_slice %138 {offsets = [1, 0], sizes = [1, 128], strides = [1, 1]} : vector<2x128xf32> to vector<1x128xf32>
    %263 = vector.extract_strided_slice %166 {offsets = [1, 0], sizes = [1, 128], strides = [1, 1]} : vector<2x128xf32> to vector<1x128xf32>
    %264 = vector.extract_strided_slice %194 {offsets = [1, 0], sizes = [1, 128], strides = [1, 1]} : vector<2x128xf32> to vector<1x128xf32>
    %265 = vector.extract_strided_slice %222 {offsets = [1, 0], sizes = [1, 128], strides = [1, 1]} : vector<2x128xf32> to vector<1x128xf32>
    %266 = vector.extract_strided_slice %250 {offsets = [1, 0], sizes = [1, 128], strides = [1, 1]} : vector<2x128xf32> to vector<1x128xf32>
    %267 = tpu.concatenate %251, %252, %253, %254, %255, %256, %257, %258, %259, %260, %261, %262, %263, %264, %265, %266 in 0 : vector<1x128xf32>, vector<1x128xf32>, vector<1x128xf32>, vector<1x128xf32>, vector<1x128xf32>, vector<1x128xf32>, vector<1x128xf32>, vector<1x128xf32>, vector<1x128xf32>, vector<1x128xf32>, vector<1x128xf32>, vector<1x128xf32>, vector<1x128xf32>, vector<1x128xf32>, vector<1x128xf32>, vector<1x128xf32> -> vector<16x128xf32>
    %268 = arith.truncf %267 : vector<16x128xf32> to vector<16x128xbf16>
    %c0_46 = arith.constant 0 : index
    %c0_47 = arith.constant 0 : index
    %269 = vector.load %arg5[%c0_46, %c0_47] : memref<128x128xbf16, #tpu.memory_space<vmem>>, vector<128x128xbf16>
    %cst_48 = arith.constant dense<0.000000e+00> : vector<16x128xf32>
    %270 = tpu.matmul %268, %269, %cst_48 {dimension_numbers = #tpu.dot_dimension_numbers<[1], [0], [0], [1], [0, 0, 1, 1], [], []>} : vector<16x128xbf16>, vector<128x128xbf16>, vector<16x128xf32> -> vector<16x128xf32>
    %c0_49 = arith.constant 0 : index
    %c0_50 = arith.constant 0 : index
    %271 = vector.load %arg6[%c0_49, %c0_50] : memref<1x128xf32, #tpu.memory_space<vmem>>, vector<1x128xf32>
    %272 = vector.broadcast %271 : vector<1x128xf32> to vector<16x128xf32>
    %273 = arith.addf %270, %272 : vector<16x128xf32>
    %274 = tpu.iota {dimensions = array<i32: 1>} : vector<16x128xi32>
    %c5_i32 = arith.constant 5 : i32
    %275 = vector.broadcast %c5_i32 : i32 to vector<16x128xi32>
    %276 = arith.cmpi slt, %274, %275 : vector<16x128xi32>
    %cst_51 = arith.constant -1.000000e+30 : f32
    %277 = vector.broadcast %cst_51 : f32 to vector<16x128xf32>
    %278 = arith.select %276, %273, %277 : vector<16x128xi1>, vector<16x128xf32>
    %cst_52 = arith.constant dense<0xFF800000> : vector<16xf32>
    %279 = vector.multi_reduction <maximumf>, %278, %cst_52 [1] : vector<16x128xf32> to vector<16xf32>
    %280 = vector.shape_cast %279 : vector<16xf32> to vector<16x1xf32>
    %281 = vector.broadcast %280 : vector<16x1xf32> to vector<16x128xf32>
    %282 = arith.subf %278, %281 : vector<16x128xf32>
    %283 = math.exp %282 : vector<16x128xf32>
    %cst_53 = arith.constant dense<0.000000e+00> : vector<16xf32>
    %284 = vector.multi_reduction <add>, %283, %cst_53 [1] : vector<16x128xf32> to vector<16xf32>
    %285 = vector.shape_cast %284 : vector<16xf32> to vector<16x1xf32>
    %286 = math.log %285 : vector<16x1xf32>
    %287 = arith.addf %280, %286 : vector<16x1xf32>
    %288 = vector.broadcast %287 : vector<16x1xf32> to vector<16x128xf32>
    %289 = arith.subf %278, %288 : vector<16x128xf32>
    %c0_54 = arith.constant 0 : index
    %c0_55 = arith.constant 0 : index
    %290 = vector.load %arg7[%c0_54, %c0_55] : memref<16x128xf32, #tpu.memory_space<vmem>>, vector<16x128xf32>
    tpu.vector_store %arg7[%c0_54, %c0_55], %289 {strides = array<i32>} : memref<16x128xf32, #tpu.memory_space<vmem>>, vector<16x128xf32>,
    return
  }
}

</mosaic_0001>

<llo_original>
// kernel: net_forward.1
$region0: #{net_forward.1}
  #allocation0 [shape = 'u32[]', space=smem, size = 0x4, offset = 0x4, fixed_abs, tag = 'smem constant byte address 0x4 - core index']
  #allocation1 [shape = 'u32[72,128]{1,0:T(1,128)}', space=vmem, size = 0x9000, scoped, tag = 'internal scratch']
  %s0 = inlined_call_operand.vmem [shape: s32[16,1], index: 0, kind: input, shape index: {}]
  %s1 = inlined_call_operand.vmem [shape: bf16[32,50], index: 1, kind: input, shape index: {}]
  %s2 = inlined_call_operand.hbm [shape: bf16[50,512], index: 2, kind: input, shape index: {}]
  %s3 = inlined_call_operand.hbm [shape: bf16[128,512], index: 3, kind: input, shape index: {}]
  %s4 = inlined_call_operand.vmem [shape: f32[1,512], index: 4, kind: input, shape index: {}]
  %s5 = inlined_call_operand.hbm [shape: bf16[128,128], index: 5, kind: input, shape index: {}]
  %s6 = inlined_call_operand.vmem [shape: f32[1,128], index: 6, kind: input, shape index: {}]
  %s7 = inlined_call_operand.vmem [shape: f32[16,128], index: 7, kind: output, shape index: {}]
  %s8 = sld [smem:[#allocation0]]
  $region50: #{net_forward.1} parent=0
    _
  %s10 = ssub.s32 1, %s8
  %s11 = scalar_select 0, %s10, %s8
  $region1: #{net_forward.1} parent=0
    #allocation2 [shape = 'u8[57344]{0}', space=vmem, size = 0xe000, scoped, tag = 'input window, operand 2, single buffered']
    #allocation3 [shape = 's32[1]{0}', space=sflag, size = 0x4, scoped, tag = 'scoped memory for net_forward.1']
    #allocation4 [shape = 'u8[131072]{0}', space=vmem, size = 0x20000, scoped, tag = 'input window, operand 3, single buffered']
    #allocation5 [shape = 's32[1]{0}', space=sflag, size = 0x4, scoped, tag = 'scoped memory for net_forward.1']
    #allocation6 [shape = 'u8[32768]{0}', space=vmem, size = 0x8000, scoped, tag = 'input window, operand 5, single buffered']
    %12 = vsyncpa [#allocation3], 0
    %13 = vsyncpa [#allocation5], 0
    // Predicated region
    $region2: #{net_forward.1} parent=1 // pred_check
      _
    $region3: #{net_forward.1} parent=1 // pred_check_branch
      %15 = sbr.rel (0) target = $region5
    $region4: #{net_forward.1} parent=1 // pred_region
      _
    $region5: #{net_forward.1} parent=1 // pred_fallthru
      _
    // Predicated region
    $region6: #{net_forward.1} parent=1 // pred_check
      _
    $region7: #{net_forward.1} parent=1 // pred_check_branch
      %17 = sbr.rel (0) target = $region9
    $region8: #{net_forward.1} parent=1 // pred_region
      _
    $region9: #{net_forward.1} parent=1 // pred_fallthru
      _
    // Predicated region
    $region10: #{net_forward.1} parent=1 // pred_check
      _
    $region11: #{net_forward.1} parent=1 // pred_check_branch
      %19 = sbr.rel (0) target = $region13
    $region12: #{net_forward.1} parent=1 // pred_region
      %21 = vsyncadd [#allocation3], 0
      %s22 = sshll.u32 %s2, 4
      %s23 = int_to_ptr.hbm [resolvable:$true] %s22
      %s24 = sshll.u32 [#allocation2], 4
      %s25 = int_to_ptr.vmem [resolvable:$true] %s24
      %30 = dma.hbm_to_vmem [thread:$0]  %s23, 1792, %s25, [#allocation3], 256, 256, 16
    $region13: #{net_forward.1} parent=1 // pred_fallthru
      _
    // Predicated region
    $region14: #{net_forward.1} parent=1 // pred_check
      _
    $region15: #{net_forward.1} parent=1 // pred_check_branch
      %32 = sbr.rel (0) target = $region17
    $region16: #{net_forward.1} parent=1 // pred_region
      %34 = vsyncadd [#allocation5], 0
      %s35 = sshll.u32 %s3, 4
      %s36 = int_to_ptr.hbm [resolvable:$true] %s35
      %s37 = sshll.u32 [#allocation4], 4
      %s38 = int_to_ptr.vmem [resolvable:$true] %s37
      %43 = dma.hbm_to_vmem [thread:$0]  %s36, 4096, %s38, [#allocation5], 256, 256, 16
    $region17: #{net_forward.1} parent=1 // pred_fallthru
      _
    // Predicated region
    $region18: #{net_forward.1} parent=1 // pred_check
      _
    $region19: #{net_forward.1} parent=1 // pred_check_branch
      %45 = sbr.rel (0) target = $region21
    $region20: #{net_forward.1} parent=1 // pred_region
      _
    $region21: #{net_forward.1} parent=1 // pred_fallthru
      _
    // Predicated region
    $region22: #{net_forward.1} parent=1 // pred_check
      _
    $region23: #{net_forward.1} parent=1 // pred_check_branch
      %47 = sbr.rel (0) target = $region25
    $region24: #{net_forward.1} parent=1 // pred_region
      %49 = vsyncadd [#allocation5], 0
      %s50 = sshll.u32 %s5, 4
      %s51 = int_to_ptr.hbm [resolvable:$true] %s50
      %s52 = sshll.u32 [#allocation6], 4
      %s53 = int_to_ptr.vmem [resolvable:$true] %s52
      %58 = dma.hbm_to_vmem [thread:$0]  %s51, 1024, %s53, [#allocation5], 64, 64, 4
    $region25: #{net_forward.1} parent=1 // pred_fallthru
      _
    // Predicated region
    $region26: #{net_forward.1} parent=1 // pred_check
      _
    $region27: #{net_forward.1} parent=1 // pred_check_branch
      %60 = sbr.rel (0) target = $region29
    $region28: #{net_forward.1} parent=1 // pred_region
      _
    $region29: #{net_forward.1} parent=1 // pred_fallthru
      _
    // Predicated region
    $region30: #{net_forward.1} parent=1 // pred_check
      _
    $region31: #{net_forward.1} parent=1 // pred_check_branch
      %62 = sbr.rel (0) target = $region33
    $region32: #{net_forward.1} parent=1 // pred_region
      %64 = dma.done [#allocation3], 1792
    $region33: #{net_forward.1} parent=1 // pred_fallthru
      _
    // Predicated region
    $region34: #{net_forward.1} parent=1 // pred_check
      _
    $region35: #{net_forward.1} parent=1 // pred_check_branch
      %66 = sbr.rel (0) target = $region37
    $region36: #{net_forward.1} parent=1 // pred_region
      %68 = dma.done [#allocation5], 4096
    $region37: #{net_forward.1} parent=1 // pred_fallthru
      _
    // Predicated region
    $region38: #{net_forward.1} parent=1 // pred_check
      _
    $region39: #{net_forward.1} parent=1 // pred_check_branch
      %70 = sbr.rel (0) target = $region41
    $region40: #{net_forward.1} parent=1 // pred_region
      %72 = dma.done [#allocation5], 1024
    $region41: #{net_forward.1} parent=1 // pred_fallthru
      _
    %v74 = vld [vmem:[%s0] sm:$0xff]
    %v75 = vld [vmem:[%s0 + $0x8] sm:$0xff]
    %v76 = vlaneseq
    %v77 = vand.u32 %v76, 127
    %78 = vset.pattern.permute.xlu0 0
    %79 = vperm.xlu0 %78, %v74
    %v80 = vpop.permute.xlu0 %79
    %81 = vset.pattern.permute.xlu0 0
    %82 = vperm.xlu0 %81, %v75
    %v83 = vpop.permute.xlu0 %82
    %vm84 = vcmp.eq.s32.totalorder %v80, %v77
    %vm85 = vcmp.eq.s32.totalorder %v83, %v77
    %v86 = vsel %vm84, 1.0, 0.0
    %v87 = vsel %vm85, 1.0, 0.0
    %v88 = vpack.c.bf16 %v87, %v86
    %v89 = vld [vmem:[%s1] sm:$0xf]
    %v90 = vld [vmem:[%s1 + $0x4] sm:$0xf]
    %v91 = vld [vmem:[%s1 + $0x8] sm:$0xf]
    %v92 = vld [vmem:[%s1 + $0xc] sm:$0xf]
    %v97 = vunpack.c.l.b16 %v89
    %v98 = vunpack.c.l.b16 %v90
    %v99 = vunpack.c.l.b16 %v91
    %v100 = vunpack.c.l.b16 %v92
    %v101 = vpack.c.b16 %v98, %v97
    %v102 = vpack.c.b16 %v100, %v99
    %vm105 = vcmask 261120
    %v107 = vsel %vm105, %v88, 0
    %109 = vmatpush.bf16.msra.mxu0 0
    %110 = vmatpush.bf16.msra.mxu0 0
    %111 = vmatpush.bf16.msra.mxu0 0
    %112 = vmatpush.bf16.msra.mxu0 0
    %113 = vmatpush.bf16.msra.mxu0 0
    %114 = vmatpush.bf16.msra.mxu0 0
    %115 = vmatpush.bf16.msra.mxu0 %v102
    %116 = vmatpush.bf16.msra.mxu0 %v101
    %117 = vmatmul.bf16.gmra.mxu0 %v107
    %v118 = vpop.f32.mrf.mxu0
    %v119 = vadd.f32 0.0, %v118
    %v120 = vpop.f32.mrf.mxu0
    %v121 = vadd.f32 0.0, %v120
    %122 = vdwg.mxu0
    %v123 = vpack.c.bf16 %v121, %v119
    %v124 = vld [vmem:[#allocation2] sm:$0xff]
    %v125 = vld [vmem:[#allocation2 + $0x8] sm:$0xff]
    %v126 = vld [vmem:[#allocation2 + $0x10] sm:$0xff]
    %v127 = vld [vmem:[#allocation2 + $0x18] sm:$0xff]
    %v128 = vld [vmem:[#allocation2 + $0x20] sm:$0xff]
    %v129 = vld [vmem:[#allocation2 + $0x28] sm:$0xff]
    %v130 = vld [vmem:[#allocation2 + $0x30] sm:$0xff]
    %v131 = vld [vmem:[#allocation2 + $0x38] sm:$0xff]
    %v132 = vld [vmem:[#allocation2 + $0x40] sm:$0xff]
    %v133 = vld [vmem:[#allocation2 + $0x48] sm:$0xff]
    %v134 = vld [vmem:[#allocation2 + $0x50] sm:$0xff]
    %v135 = vld [vmem:[#allocation2 + $0x58] sm:$0xff]
    %v136 = vld [vmem:[#allocation2 + $0x60] sm:$0x11]
    %v137 = vld [vmem:[#allocation2 + $0x68] sm:$0x11]
    %v138 = vld [vmem:[%s4] sm:$0xf]
    %v140 = vperm.slane %v138, 0
    %v141 = vperm.slane %v138, 1
    %v142 = vperm.slane %v138, 2
    %v143 = vperm.slane %v138, 3
    %v162 = vunpack.c.l.b16 %v124
    %v163 = vunpack.c.h.b16 %v124
    %v164 = vunpack.c.l.b16 %v125
    %v165 = vunpack.c.h.b16 %v125
    %v166 = vunpack.c.l.b16 %v126
    %v167 = vunpack.c.h.b16 %v126
    %v168 = vunpack.c.l.b16 %v127
    %v169 = vunpack.c.h.b16 %v127
    %v170 = vunpack.c.l.b16 %v128
    %v171 = vunpack.c.h.b16 %v128
    %v172 = vunpack.c.l.b16 %v129
    %v173 = vunpack.c.h.b16 %v129
    %v174 = vunpack.c.l.b16 %v130
    %v175 = vunpack.c.h.b16 %v130
    %v176 = vunpack.c.l.b16 %v131
    %v177 = vunpack.c.h.b16 %v131
    %v178 = vunpack.c.l.b16 %v132
    %v179 = vunpack.c.h.b16 %v132
    %v180 = vunpack.c.l.b16 %v133
    %v181 = vunpack.c.h.b16 %v133
    %v182 = vunpack.c.l.b16 %v134
    %v183 = vunpack.c.h.b16 %v134
    %v184 = vunpack.c.l.b16 %v135
    %v185 = vunpack.c.h.b16 %v135
    %v186 = vunpack.c.l.b16 %v136
    %v187 = vunpack.c.h.b16 %v136
    %v188 = vunpack.c.l.b16 %v137
    %v189 = vunpack.c.h.b16 %v137
    %v190 = vpack.c.b16 %v166, %v162
    %v191 = vpack.c.b16 %v167, %v163
    %v192 = vpack.c.b16 %v168, %v164
    %v193 = vpack.c.b16 %v169, %v165
    %v194 = vpack.c.b16 %v174, %v170
    %v195 = vpack.c.b16 %v175, %v171
    %v196 = vpack.c.b16 %v176, %v172
    %v197 = vpack.c.b16 %v177, %v173
    %v198 = vpack.c.b16 %v182, %v178
    %v199 = vpack.c.b16 %v183, %v179
    %v200 = vpack.c.b16 %v184, %v180
    %v201 = vpack.c.b16 %v185, %v181
    %v202 = vpack.c.b16 %v186, %v186
    %v203 = vpack.c.b16 %v187, %v187
    %v204 = vpack.c.b16 %v188, %v188
    %v205 = vpack.c.b16 %v189, %v189
    %vm218 = vcmask 408576
    %v220 = vsel %vm218, %v123, 0
    %vm222 = vcmask 1040384
    %v224 = vsel %vm222, %v202, 0
    %v227 = vsel %vm222, %v203, 0
    %v230 = vsel %vm222, %v204, 0
    %v233 = vsel %vm222, %v205, 0
    %235 = vmatpush.bf16.msra.mxu0 0
    %236 = vmatpush.bf16.msra.mxu0 0
    %237 = vmatpush.bf16.msra.mxu0 0
    %238 = vmatpush.bf16.msra.mxu0 0
    %239 = vmatpush.bf16.msra.mxu0 %v224
    %240 = vmatpush.bf16.msra.mxu0 %v198
    %241 = vmatpush.bf16.msra.mxu0 %v194
    %242 = vmatpush.bf16.msra.mxu0 %v190
    %243 = vmatmul.bf16.gmra.mxu0 %v220
    %v244 = vpop.f32.mrf.mxu0
    %v245 = vadd.f32 %v140, %v244
    %v246 = vpop.f32.mrf.mxu0
    %v247 = vadd.f32 %v140, %v246
    %248 = vdwg.mxu0
    %249 = vmatpush.bf16.msra.mxu0 0
    %250 = vmatpush.bf16.msra.mxu0 0
    %251 = vmatpush.bf16.msra.mxu0 0
    %252 = vmatpush.bf16.msra.mxu0 0
    %253 = vmatpush.bf16.msra.mxu0 %v227
    %254 = vmatpush.bf16.msra.mxu0 %v199
    %255 = vmatpush.bf16.msra.mxu0 %v195
    %256 = vmatpush.bf16.msra.mxu0 %v191
    %257 = vmatmul.bf16.gmra.mxu0 %v220
    %v258 = vpop.f32.mrf.mxu0
    %v259 = vadd.f32 %v141, %v258
    %v260 = vpop.f32.mrf.mxu0
    %v261 = vadd.f32 %v141, %v260
    %262 = vdwg.mxu0
    %263 = vmatpush.bf16.msra.mxu0 0
    %264 = vmatpush.bf16.msra.mxu0 0
    %265 = vmatpush.bf16.msra.mxu0 0
    %266 = vmatpush.bf16.msra.mxu0 0
    %267 = vmatpush.bf16.msra.mxu0 %v230
    %268 = vmatpush.bf16.msra.mxu0 %v200
    %269 = vmatpush.bf16.msra.mxu0 %v196
    %270 = vmatpush.bf16.msra.mxu0 %v192
    %271 = vmatmul.bf16.gmra.mxu0 %v220
    %v272 = vpop.f32.mrf.mxu0
    %v273 = vadd.f32 %v142, %v272
    %v274 = vpop.f32.mrf.mxu0
    %v275 = vadd.f32 %v142, %v274
    %276 = vdwg.mxu0
    %277 = vmatpush.bf16.msra.mxu0 0
    %278 = vmatpush.bf16.msra.mxu0 0
    %279 = vmatpush.bf16.msra.mxu0 0
    %280 = vmatpush.bf16.msra.mxu0 0
    %281 = vmatpush.bf16.msra.mxu0 %v233
    %282 = vmatpush.bf16.msra.mxu0 %v201
    %283 = vmatpush.bf16.msra.mxu0 %v197
    %284 = vmatpush.bf16.msra.mxu0 %v193
    %285 = vmatmul.bf16.gmra.mxu0 %v220
    %v286 = vpop.f32.mrf.mxu0
    %v287 = vadd.f32 %v143, %v286
    %v288 = vpop.f32.mrf.mxu0
    %v289 = vadd.f32 %v143, %v288
    %290 = vdwg.mxu0
    %v291 = vld [vmem:[#allocation4] sm:$0xff]
    %v292 = vld [vmem:[#allocation4 + $0x8] sm:$0xff]
    %v293 = vld [vmem:[#allocation4 + $0x10] sm:$0xff]
    %v294 = vld [vmem:[#allocation4 + $0x18] sm:$0xff]
    %v295 = vld [vmem:[#allocation4 + $0x20] sm:$0xff]
    %v296 = vld [vmem:[#allocation4 + $0x28] sm:$0xff]
    %v297 = vld [vmem:[#allocation4 + $0x30] sm:$0xff]
    %v298 = vld [vmem:[#allocation4 + $0x38] sm:$0xff]
    %v299 = vld [vmem:[#allocation4 + $0x40] sm:$0xff]
    %v300 = vld [vmem:[#allocation4 + $0x48] sm:$0xff]
    %v301 = vld [vmem:[#allocation4 + $0x50] sm:$0xff]
    %v302 = vld [vmem:[#allocation4 + $0x58] sm:$0xff]
    %v303 = vld [vmem:[#allocation4 + $0x60] sm:$0xff]
    %v304 = vld [vmem:[#allocation4 + $0x68] sm:$0xff]
    %v305 = vld [vmem:[#allocation4 + $0x70] sm:$0xff]
    %v306 = vld [vmem:[#allocation4 + $0x78] sm:$0xff]
    %v307 = vld [vmem:[#allocation4 + $0x80] sm:$0xff]
    %v308 = vld [vmem:[#allocation4 + $0x88] sm:$0xff]
    %v309 = vld [vmem:[#allocation4 + $0x90] sm:$0xff]
    %v310 = vld [vmem:[#allocation4 + $0x98] sm:$0xff]
    %v311 = vld [vmem:[#allocation4 + $0xa0] sm:$0xff]
    %v312 = vld [vmem:[#allocation4 + $0xa8] sm:$0xff]
    %v313 = vld [vmem:[#allocation4 + $0xb0] sm:$0xff]
    %v314 = vld [vmem:[#allocation4 + $0xb8] sm:$0xff]
    %v315 = vld [vmem:[#allocation4 + $0xc0] sm:$0xff]
    %v316 = vld [vmem:[#allocation4 + $0xc8] sm:$0xff]
    %v317 = vld [vmem:[#allocation4 + $0xd0] sm:$0xff]
    %v318 = vld [vmem:[#allocation4 + $0xd8] sm:$0xff]
    %v319 = vld [vmem:[#allocation4 + $0xe0] sm:$0xff]
    %v320 = vld [vmem:[#allocation4 + $0xe8] sm:$0xff]
    %v321 = vld [vmem:[#allocation4 + $0xf0] sm:$0xff]
    %v322 = vld [vmem:[#allocation4 + $0xf8] sm:$0xff]
    %v355 = vunpack.c.l.b16 %v291
    %v356 = vunpack.c.h.b16 %v291
    %v357 = vunpack.c.l.b16 %v292
    %v358 = vunpack.c.h.b16 %v292
    %v359 = vunpack.c.l.b16 %v293
    %v360 = vunpack.c.h.b16 %v293
    %v361 = vunpack.c.l.b16 %v294
    %v362 = vunpack.c.h.b16 %v294
    %v363 = vunpack.c.l.b16 %v295
    %v364 = vunpack.c.h.b16 %v295
    %v365 = vunpack.c.l.b16 %v296
    %v366 = vunpack.c.h.b16 %v296
    %v367 = vunpack.c.l.b16 %v297
    %v368 = vunpack.c.h.b16 %v297
    %v369 = vunpack.c.l.b16 %v298
    %v370 = vunpack.c.h.b16 %v298
    %v371 = vunpack.c.l.b16 %v299
    %v372 = vunpack.c.h.b16 %v299
    %v373 = vunpack.c.l.b16 %v300
    %v374 = vunpack.c.h.b16 %v300
    %v375 = vunpack.c.l.b16 %v301
    %v376 = vunpack.c.h.b16 %v301
    %v377 = vunpack.c.l.b16 %v302
    %v378 = vunpack.c.h.b16 %v302
    %v379 = vunpack.c.l.b16 %v303
    %v380 = vunpack.c.h.b16 %v303
    %v381 = vunpack.c.l.b16 %v304
    %v382 = vunpack.c.h.b16 %v304
    %v383 = vunpack.c.l.b16 %v305
    %v384 = vunpack.c.h.b16 %v305
    %v385 = vunpack.c.l.b16 %v306
    %v386 = vunpack.c.h.b16 %v306
    %v387 = vunpack.c.l.b16 %v307
    %v388 = vunpack.c.h.b16 %v307
    %v389 = vunpack.c.l.b16 %v308
    %v390 = vunpack.c.h.b16 %v308
    %v391 = vunpack.c.l.b16 %v309
    %v392 = vunpack.c.h.b16 %v309
    %v393 = vunpack.c.l.b16 %v310
    %v394 = vunpack.c.h.b16 %v310
    %v395 = vunpack.c.l.b16 %v311
    %v396 = vunpack.c.h.b16 %v311
    %v397 = vunpack.c.l.b16 %v312
    %v398 = vunpack.c.h.b16 %v312
    %v399 = vunpack.c.l.b16 %v313
    %v400 = vunpack.c.h.b16 %v313
    %v401 = vunpack.c.l.b16 %v314
    %v402 = vunpack.c.h.b16 %v314
    %v403 = vunpack.c.l.b16 %v315
    %v404 = vunpack.c.h.b16 %v315
    %v405 = vunpack.c.l.b16 %v316
    %v406 = vunpack.c.h.b16 %v316
    %v407 = vunpack.c.l.b16 %v317
    %v408 = vunpack.c.h.b16 %v317
    %v409 = vunpack.c.l.b16 %v318
    %v410 = vunpack.c.h.b16 %v318
    %v411 = vunpack.c.l.b16 %v319
    %v412 = vunpack.c.h.b16 %v319
    %v413 = vunpack.c.l.b16 %v320
    %v414 = vunpack.c.h.b16 %v320
    %v415 = vunpack.c.l.b16 %v321
    %v416 = vunpack.c.h.b16 %v321
    %v417 = vunpack.c.l.b16 %v322
    %v418 = vunpack.c.h.b16 %v322
    %v419 = vpack.c.b16 %v359, %v355
    %v420 = vpack.c.b16 %v360, %v356
    %v421 = vpack.c.b16 %v361, %v357
    %v422 = vpack.c.b16 %v362, %v358
    %v423 = vpack.c.b16 %v367, %v363
    %v424 = vpack.c.b16 %v368, %v364
    %v425 = vpack.c.b16 %v369, %v365
    %v426 = vpack.c.b16 %v370, %v366
    %v427 = vpack.c.b16 %v375, %v371
    %v428 = vpack.c.b16 %v376, %v372
    %v429 = vpack.c.b16 %v377, %v373
    %v430 = vpack.c.b16 %v378, %v374
    %v431 = vpack.c.b16 %v383, %v379
    %v432 = vpack.c.b16 %v384, %v380
    %v433 = vpack.c.b16 %v385, %v381
    %v434 = vpack.c.b16 %v386, %v382
    %v435 = vpack.c.b16 %v391, %v387
    %v436 = vpack.c.b16 %v392, %v388
    %v437 = vpack.c.b16 %v393, %v389
    %v438 = vpack.c.b16 %v394, %v390
    %v439 = vpack.c.b16 %v399, %v395
    %v440 = vpack.c.b16 %v400, %v396
    %v441 = vpack.c.b16 %v401, %v397
    %v442 = vpack.c.b16 %v402, %v398
    %v443 = vpack.c.b16 %v407, %v403
    %v444 = vpack.c.b16 %v408, %v404
    %v445 = vpack.c.b16 %v409, %v405
    %v446 = vpack.c.b16 %v410, %v406
    %v447 = vpack.c.b16 %v415, %v411
    %v448 = vpack.c.b16 %v416, %v412
    %v449 = vpack.c.b16 %v417, %v413
    %v450 = vpack.c.b16 %v418, %v414
    %483 = vmatpush.bf16.msra.mxu0 %v447
    %484 = vmatpush.bf16.msra.mxu0 %v443
    %485 = vmatpush.bf16.msra.mxu0 %v439
    %486 = vmatpush.bf16.msra.mxu0 %v435
    %487 = vmatpush.bf16.msra.mxu0 %v431
    %488 = vmatpush.bf16.msra.mxu0 %v427
    %489 = vmatpush.bf16.msra.mxu0 %v423
    %490 = vmatpush.bf16.msra.mxu0 %v419
    %491 = vmatmul.bf16.gmra.mxu0 0
    %v492 = vpop.f32.mrf.mxu0
    %v493 = vadd.f32 0.0, %v492
    %v494 = vpop.f32.mrf.mxu0
    %495 = vdwg.mxu0
    %496 = vmatpush.bf16.msra.mxu0 %v448
    %497 = vmatpush.bf16.msra.mxu0 %v444
    %498 = vmatpush.bf16.msra.mxu0 %v440
    %499 = vmatpush.bf16.msra.mxu0 %v436
    %500 = vmatpush.bf16.msra.mxu0 %v432
    %501 = vmatpush.bf16.msra.mxu0 %v428
    %502 = vmatpush.bf16.msra.mxu0 %v424
    %503 = vmatpush.bf16.msra.mxu0 %v420
    %504 = vmatmul.bf16.gmra.mxu0 0
    %v505 = vpop.f32.mrf.mxu0
    %v506 = vadd.f32 0.0, %v505
    %v507 = vpop.f32.mrf.mxu0
    %508 = vdwg.mxu0
    %509 = vmatpush.bf16.msra.mxu0 %v449
    %510 = vmatpush.bf16.msra.mxu0 %v445
    %511 = vmatpush.bf16.msra.mxu0 %v441
    %512 = vmatpush.bf16.msra.mxu0 %v437
    %513 = vmatpush.bf16.msra.mxu0 %v433
    %514 = vmatpush.bf16.msra.mxu0 %v429
    %515 = vmatpush.bf16.msra.mxu0 %v425
    %516 = vmatpush.bf16.msra.mxu0 %v421
    %517 = vmatmul.bf16.gmra.mxu0 0
    %v518 = vpop.f32.mrf.mxu0
    %v519 = vadd.f32 0.0, %v518
    %v520 = vpop.f32.mrf.mxu0
    %521 = vdwg.mxu0
    %522 = vmatpush.bf16.msra.mxu0 %v450
    %523 = vmatpush.bf16.msra.mxu0 %v446
    %524 = vmatpush.bf16.msra.mxu0 %v442
    %525 = vmatpush.bf16.msra.mxu0 %v438
    %526 = vmatpush.bf16.msra.mxu0 %v434
    %527 = vmatpush.bf16.msra.mxu0 %v430
    %528 = vmatpush.bf16.msra.mxu0 %v426
    %529 = vmatpush.bf16.msra.mxu0 %v422
    %530 = vmatmul.bf16.gmra.mxu0 0
    %v531 = vpop.f32.mrf.mxu0
    %v532 = vadd.f32 0.0, %v531
    %v533 = vpop.f32.mrf.mxu0
    %534 = vdwg.mxu0
    %v535 = vadd.f32 %v245, %v493
    %v536 = vadd.f32 %v259, %v506
    %v537 = vadd.f32 %v273, %v519
    %v538 = vadd.f32 %v287, %v532
    %v539 = vxor.u32 %v535, 2147483648
    %v540 = vmul.f32 %v539, 1.442695
    %v541 = vpow.pop %v540
    %v542 = vadd.f32 %v541, 1.0
    %v543 = vrcp.pop %v542
    %v544 = vmul.f32 %v542, %v543
    %v545 = vsub.f32 1.0, %v544
    %v546 = vmul.f32 %v543, %v545
    %v547 = vadd.f32 %v543, %v546
    %vm548 = vweird.f32 %v542
    %vm549 = vweird.f32 %v543
    %vm550 = vmor %vm548, %vm549
    %v551 = vsel %vm550, %v543, %v547
    %v552 = vand.u32 2147483647, %v542
    %vm553 = vcmp.eq.f32.partialorder %v552, 8.507059e+37
    %v554 = vand.u32 %v542, 2147483648
    %v555 = vor.u32 1.1754944e-38, %v554
    %v556 = vsel %vm553, %v555, %v551
    %v557 = vmul.f32 1.0, %v556
    %v558 = vxor.u32 %v536, 2147483648
    %v559 = vmul.f32 %v558, 1.442695
    %v560 = vpow.pop %v559
    %v561 = vadd.f32 %v560, 1.0
    %v562 = vrcp.pop %v561
    %v563 = vmul.f32 %v561, %v562
    %v564 = vsub.f32 1.0, %v563
    %v565 = vmul.f32 %v562, %v564
    %v566 = vadd.f32 %v562, %v565
    %vm567 = vweird.f32 %v561
    %vm568 = vweird.f32 %v562
    %vm569 = vmor %vm567, %vm568
    %v570 = vsel %vm569, %v562, %v566
    %v571 = vand.u32 2147483647, %v561
    %vm572 = vcmp.eq.f32.partialorder %v571, 8.507059e+37
    %v573 = vand.u32 %v561, 2147483648
    %v574 = vor.u32 1.1754944e-38, %v573
    %v575 = vsel %vm572, %v574, %v570
    %v576 = vmul.f32 1.0, %v575
    %v577 = vtanh.pop %v537
    %v578 = vxor.u32 %v538, 2147483648
    %v579 = vmul.f32 %v578, 1.442695
    %v580 = vpow.pop %v579
    %v581 = vadd.f32 %v580, 1.0
    %v582 = vrcp.pop %v581
    %v583 = vmul.f32 %v581, %v582
    %v584 = vsub.f32 1.0, %v583
    %v585 = vmul.f32 %v582, %v584
    %v586 = vadd.f32 %v582, %v585
    %vm587 = vweird.f32 %v581
    %vm588 = vweird.f32 %v582
    %vm589 = vmor %vm587, %vm588
    %v590 = vsel %vm589, %v582, %v586
    %v591 = vand.u32 2147483647, %v581
    %vm592 = vcmp.eq.f32.partialorder %v591, 8.507059e+37
    %v593 = vand.u32 %v581, 2147483648
    %v594 = vor.u32 1.1754944e-38, %v593
    %v595 = vsel %vm592, %v594, %v590
    %v596 = vmul.f32 1.0, %v595
    %v597 = vmul.f32 %v576, 0.0
    %v598 = vmul.f32 %v557, %v577
    %v599 = vadd.f32 %v597, %v598
    %v600 = vtanh.pop %v599
    %v601 = vmul.f32 %v596, %v600
    %v602 = vpack.c.bf16 %v601, %v601
    %603 = vmatpush.bf16.msra.mxu0 %v447
    %604 = vmatpush.bf16.msra.mxu0 %v443
    %605 = vmatpush.bf16.msra.mxu0 %v439
    %606 = vmatpush.bf16.msra.mxu0 %v435
    %607 = vmatpush.bf16.msra.mxu0 %v431
    %608 = vmatpush.bf16.msra.mxu0 %v427
    %609 = vmatpush.bf16.msra.mxu0 %v423
    %610 = vmatpush.bf16.msra.mxu0 %v419
    %611 = vmatmul.bf16.gmra.mxu0 %v602
    %v612 = vpop.f32.mrf.mxu0
    %v613 = vadd.f32 0.0, %v612
    %v614 = vpop.f32.mrf.mxu0
    %615 = vdwg.mxu0
    %616 = vmatpush.bf16.msra.mxu0 %v448
    %617 = vmatpush.bf16.msra.mxu0 %v444
    %618 = vmatpush.bf16.msra.mxu0 %v440
    %619 = vmatpush.bf16.msra.mxu0 %v436
    %620 = vmatpush.bf16.msra.mxu0 %v432
    %621 = vmatpush.bf16.msra.mxu0 %v428
    %622 = vmatpush.bf16.msra.mxu0 %v424
    %623 = vmatpush.bf16.msra.mxu0 %v420
    %624 = vmatmul.bf16.gmra.mxu0 %v602
    %v625 = vpop.f32.mrf.mxu0
    %v626 = vadd.f32 0.0, %v625
    %v627 = vpop.f32.mrf.mxu0
    %628 = vdwg.mxu0
    %629 = vmatpush.bf16.msra.mxu0 %v449
    %630 = vmatpush.bf16.msra.mxu0 %v445
    %631 = vmatpush.bf16.msra.mxu0 %v441
    %632 = vmatpush.bf16.msra.mxu0 %v437
    %633 = vmatpush.bf16.msra.mxu0 %v433
    %634 = vmatpush.bf16.msra.mxu0 %v429
    %635 = vmatpush.bf16.msra.mxu0 %v425
    %636 = vmatpush.bf16.msra.mxu0 %v421
    %637 = vmatmul.bf16.gmra.mxu0 %v602
    %v638 = vpop.f32.mrf.mxu0
    %v639 = vadd.f32 0.0, %v638
    %v640 = vpop.f32.mrf.mxu0
    %641 = vdwg.mxu0
    %642 = vmatpush.bf16.msra.mxu0 %v450
    %643 = vmatpush.bf16.msra.mxu0 %v446
    %644 = vmatpush.bf16.msra.mxu0 %v442
    %645 = vmatpush.bf16.msra.mxu0 %v438
    %646 = vmatpush.bf16.msra.mxu0 %v434
    %647 = vmatpush.bf16.msra.mxu0 %v430
    %648 = vmatpush.bf16.msra.mxu0 %v426
    %649 = vmatpush.bf16.msra.mxu0 %v422
    %650 = vmatmul.bf16.gmra.mxu0 %v602
    %v651 = vpop.f32.mrf.mxu0
    %v652 = vadd.f32 0.0, %v651
    %v653 = vpop.f32.mrf.mxu0
    %654 = vdwg.mxu0
    %v659 = vrot.slane %v613, 6
    %v660 = vrot.slane %v626, 6
    %v661 = vrot.slane %v639, 6
    %v662 = vrot.slane %v652, 6
    %v667 = vadd.f32 %v245, %v659
    %v668 = vadd.f32 %v259, %v660
    %v669 = vadd.f32 %v273, %v661
    %v670 = vadd.f32 %v287, %v662
    %v671 = vxor.u32 %v667, 2147483648
    %v672 = vmul.f32 %v671, 1.442695
    %v673 = vpow.pop %v672
    %v674 = vadd.f32 %v673, 1.0
    %v675 = vrcp.pop %v674
    %v676 = vmul.f32 %v674, %v675
    %v677 = vsub.f32 1.0, %v676
    %v678 = vmul.f32 %v675, %v677
    %v679 = vadd.f32 %v675, %v678
    %vm680 = vweird.f32 %v674
    %vm681 = vweird.f32 %v675
    %vm682 = vmor %vm680, %vm681
    %v683 = vsel %vm682, %v675, %v679
    %v684 = vand.u32 2147483647, %v674
    %vm685 = vcmp.eq.f32.partialorder %v684, 8.507059e+37
    %v686 = vand.u32 %v674, 2147483648
    %v687 = vor.u32 1.1754944e-38, %v686
    %v688 = vsel %vm685, %v687, %v683
    %v689 = vmul.f32 1.0, %v688
    %v690 = vxor.u32 %v668, 2147483648
    %v691 = vmul.f32 %v690, 1.442695
    %v692 = vpow.pop %v691
    %v693 = vadd.f32 %v692, 1.0
    %v694 = vrcp.pop %v693
    %v695 = vmul.f32 %v693, %v694
    %v696 = vsub.f32 1.0, %v695
    %v697 = vmul.f32 %v694, %v696
    %v698 = vadd.f32 %v694, %v697
    %vm699 = vweird.f32 %v693
    %vm700 = vweird.f32 %v694
    %vm701 = vmor %vm699, %vm700
    %v702 = vsel %vm701, %v694, %v698
    %v703 = vand.u32 2147483647, %v693
    %vm704 = vcmp.eq.f32.partialorder %v703, 8.507059e+37
    %v705 = vand.u32 %v693, 2147483648
    %v706 = vor.u32 1.1754944e-38, %v705
    %v707 = vsel %vm704, %v706, %v702
    %v708 = vmul.f32 1.0, %v707
    %v709 = vtanh.pop %v669
    %v710 = vxor.u32 %v670, 2147483648
    %v711 = vmul.f32 %v710, 1.442695
    %v712 = vpow.pop %v711
    %v713 = vadd.f32 %v712, 1.0
    %v714 = vrcp.pop %v713
    %v715 = vmul.f32 %v713, %v714
    %v716 = vsub.f32 1.0, %v715
    %v717 = vmul.f32 %v714, %v716
    %v718 = vadd.f32 %v714, %v717
    %vm719 = vweird.f32 %v713
    %vm720 = vweird.f32 %v714
    %vm721 = vmor %vm719, %vm720
    %v722 = vsel %vm721, %v714, %v718
    %v723 = vand.u32 2147483647, %v713
    %vm724 = vcmp.eq.f32.partialorder %v723, 8.507059e+37
    %v725 = vand.u32 %v713, 2147483648
    %v726 = vor.u32 1.1754944e-38, %v725
    %v727 = vsel %vm724, %v726, %v722
    %v728 = vmul.f32 1.0, %v727
    %v730 = vrot.slane %v599, 6
    %v732 = vmul.f32 %v708, %v730
    %v733 = vmul.f32 %v689, %v709
    %v734 = vadd.f32 %v732, %v733
    %v735 = vtanh.pop %v734
    %v736 = vmul.f32 %v728, %v735
    %v737 = vpack.c.bf16 %v736, %v736
    %v739 = vrot.slane %v737, 1
    %741 = vmatpush.bf16.msra.mxu0 %v447
    %742 = vmatpush.bf16.msra.mxu0 %v443
    %743 = vmatpush.bf16.msra.mxu0 %v439
    %744 = vmatpush.bf16.msra.mxu0 %v435
    %745 = vmatpush.bf16.msra.mxu0 %v431
    %746 = vmatpush.bf16.msra.mxu0 %v427
    %747 = vmatpush.bf16.msra.mxu0 %v423
    %748 = vmatpush.bf16.msra.mxu0 %v419
    %749 = vmatmul.bf16.gmra.mxu0 %v739
    %v750 = vpop.f32.mrf.mxu0
    %v751 = vadd.f32 0.0, %v750
    %v752 = vpop.f32.mrf.mxu0
    %753 = vdwg.mxu0
    %754 = vmatpush.bf16.msra.mxu0 %v448
    %755 = vmatpush.bf16.msra.mxu0 %v444
    %756 = vmatpush.bf16.msra.mxu0 %v440
    %757 = vmatpush.bf16.msra.mxu0 %v436
    %758 = vmatpush.bf16.msra.mxu0 %v432
    %759 = vmatpush.bf16.msra.mxu0 %v428
    %760 = vmatpush.bf16.msra.mxu0 %v424
    %761 = vmatpush.bf16.msra.mxu0 %v420
    %762 = vmatmul.bf16.gmra.mxu0 %v739
    %v763 = vpop.f32.mrf.mxu0
    %v764 = vadd.f32 0.0, %v763
    %v765 = vpop.f32.mrf.mxu0
    %766 = vdwg.mxu0
    %767 = vmatpush.bf16.msra.mxu0 %v449
    %768 = vmatpush.bf16.msra.mxu0 %v445
    %769 = vmatpush.bf16.msra.mxu0 %v441
    %770 = vmatpush.bf16.msra.mxu0 %v437
    %771 = vmatpush.bf16.msra.mxu0 %v433
    %772 = vmatpush.bf16.msra.mxu0 %v429
    %773 = vmatpush.bf16.msra.mxu0 %v425
    %774 = vmatpush.bf16.msra.mxu0 %v421
    %775 = vmatmul.bf16.gmra.mxu0 %v739
    %v776 = vpop.f32.mrf.mxu0
    %v777 = vadd.f32 0.0, %v776
    %v778 = vpop.f32.mrf.mxu0
    %779 = vdwg.mxu0
    %780 = vmatpush.bf16.msra.mxu0 %v450
    %781 = vmatpush.bf16.msra.mxu0 %v446
    %782 = vmatpush.bf16.msra.mxu0 %v442
    %783 = vmatpush.bf16.msra.mxu0 %v438
    %784 = vmatpush.bf16.msra.mxu0 %v434
    %785 = vmatpush.bf16.msra.mxu0 %v430
    %786 = vmatpush.bf16.msra.mxu0 %v426
    %787 = vmatpush.bf16.msra.mxu0 %v422
    %788 = vmatmul.bf16.gmra.mxu0 %v739
    %v789 = vpop.f32.mrf.mxu0
    %v790 = vadd.f32 0.0, %v789
    %v791 = vpop.f32.mrf.mxu0
    %792 = vdwg.mxu0
    %v797 = vrot.slane %v751, 4
    %v798 = vrot.slane %v764, 4
    %v799 = vrot.slane %v777, 4
    %v800 = vrot.slane %v790, 4
    %v805 = vadd.f32 %v245, %v797
    %v806 = vadd.f32 %v259, %v798
    %v807 = vadd.f32 %v273, %v799
    %v808 = vadd.f32 %v287, %v800
    %v809 = vxor.u32 %v805, 2147483648
    %v810 = vmul.f32 %v809, 1.442695
    %v811 = vpow.pop %v810
    %v812 = vadd.f32 %v811, 1.0
    %v813 = vrcp.pop %v812
    %v814 = vmul.f32 %v812, %v813
    %v815 = vsub.f32 1.0, %v814
    %v816 = vmul.f32 %v813, %v815
    %v817 = vadd.f32 %v813, %v816
    %vm818 = vweird.f32 %v812
    %vm819 = vweird.f32 %v813
    %vm820 = vmor %vm818, %vm819
    %v821 = vsel %vm820, %v813, %v817
    %v822 = vand.u32 2147483647, %v812
    %vm823 = vcmp.eq.f32.partialorder %v822, 8.507059e+37
    %v824 = vand.u32 %v812, 2147483648
    %v825 = vor.u32 1.1754944e-38, %v824
    %v826 = vsel %vm823, %v825, %v821
    %v827 = vmul.f32 1.0, %v826
    %v828 = vxor.u32 %v806, 2147483648
    %v829 = vmul.f32 %v828, 1.442695
    %v830 = vpow.pop %v829
    %v831 = vadd.f32 %v830, 1.0
    %v832 = vrcp.pop %v831
    %v833 = vmul.f32 %v831, %v832
    %v834 = vsub.f32 1.0, %v833
    %v835 = vmul.f32 %v832, %v834
    %v836 = vadd.f32 %v832, %v835
    %vm837 = vweird.f32 %v831
    %vm838 = vweird.f32 %v832
    %vm839 = vmor %vm837, %vm838
    %v840 = vsel %vm839, %v832, %v836
    %v841 = vand.u32 2147483647, %v831
    %vm842 = vcmp.eq.f32.partialorder %v841, 8.507059e+37
    %v843 = vand.u32 %v831, 2147483648
    %v844 = vor.u32 1.1754944e-38, %v843
    %v845 = vsel %vm842, %v844, %v840
    %v846 = vmul.f32 1.0, %v845
    %v847 = vtanh.pop %v807
    %v848 = vxor.u32 %v808, 2147483648
    %v849 = vmul.f32 %v848, 1.442695
    %v850 = vpow.pop %v849
    %v851 = vadd.f32 %v850, 1.0
    %v852 = vrcp.pop %v851
    %v853 = vmul.f32 %v851, %v852
    %v854 = vsub.f32 1.0, %v853
    %v855 = vmul.f32 %v852, %v854
    %v856 = vadd.f32 %v852, %v855
    %vm857 = vweird.f32 %v851
    %vm858 = vweird.f32 %v852
    %vm859 = vmor %vm857, %vm858
    %v860 = vsel %vm859, %v852, %v856
    %v861 = vand.u32 2147483647, %v851
    %vm862 = vcmp.eq.f32.partialorder %v861, 8.507059e+37
    %v863 = vand.u32 %v851, 2147483648
    %v864 = vor.u32 1.1754944e-38, %v863
    %v865 = vsel %vm862, %v864, %v860
    %v866 = vmul.f32 1.0, %v865
    %v868 = vrot.slane %v734, 6
    %v870 = vmul.f32 %v846, %v868
    %v871 = vmul.f32 %v827, %v847
    %v872 = vadd.f32 %v870, %v871
    %v873 = vtanh.pop %v872
    %v874 = vmul.f32 %v866, %v873
    %v875 = vpack.c.bf16 %v874, %v874
    %v877 = vrot.slane %v875, 2
    %879 = vmatpush.bf16.msra.mxu0 %v447
    %880 = vmatpush.bf16.msra.mxu0 %v443
    %881 = vmatpush.bf16.msra.mxu0 %v439
    %882 = vmatpush.bf16.msra.mxu0 %v435
    %883 = vmatpush.bf16.msra.mxu0 %v431
    %884 = vmatpush.bf16.msra.mxu0 %v427
    %885 = vmatpush.bf16.msra.mxu0 %v423
    %886 = vmatpush.bf16.msra.mxu0 %v419
    %887 = vmatmul.bf16.gmra.mxu0 %v877
    %v888 = vpop.f32.mrf.mxu0
    %v889 = vadd.f32 0.0, %v888
    %v890 = vpop.f32.mrf.mxu0
    %891 = vdwg.mxu0
    %892 = vmatpush.bf16.msra.mxu0 %v448
    %893 = vmatpush.bf16.msra.mxu0 %v444
    %894 = vmatpush.bf16.msra.mxu0 %v440
    %895 = vmatpush.bf16.msra.mxu0 %v436
    %896 = vmatpush.bf16.msra.mxu0 %v432
    %897 = vmatpush.bf16.msra.mxu0 %v428
    %898 = vmatpush.bf16.msra.mxu0 %v424
    %899 = vmatpush.bf16.msra.mxu0 %v420
    %900 = vmatmul.bf16.gmra.mxu0 %v877
    %v901 = vpop.f32.mrf.mxu0
    %v902 = vadd.f32 0.0, %v901
    %v903 = vpop.f32.mrf.mxu0
    %904 = vdwg.mxu0
    %905 = vmatpush.bf16.msra.mxu0 %v449
    %906 = vmatpush.bf16.msra.mxu0 %v445
    %907 = vmatpush.bf16.msra.mxu0 %v441
    %908 = vmatpush.bf16.msra.mxu0 %v437
    %909 = vmatpush.bf16.msra.mxu0 %v433
    %910 = vmatpush.bf16.msra.mxu0 %v429
    %911 = vmatpush.bf16.msra.mxu0 %v425
    %912 = vmatpush.bf16.msra.mxu0 %v421
    %913 = vmatmul.bf16.gmra.mxu0 %v877
    %v914 = vpop.f32.mrf.mxu0
    %v915 = vadd.f32 0.0, %v914
    %v916 = vpop.f32.mrf.mxu0
    %917 = vdwg.mxu0
    %918 = vmatpush.bf16.msra.mxu0 %v450
    %919 = vmatpush.bf16.msra.mxu0 %v446
    %920 = vmatpush.bf16.msra.mxu0 %v442
    %921 = vmatpush.bf16.msra.mxu0 %v438
    %922 = vmatpush.bf16.msra.mxu0 %v434
    %923 = vmatpush.bf16.msra.mxu0 %v430
    %924 = vmatpush.bf16.msra.mxu0 %v426
    %925 = vmatpush.bf16.msra.mxu0 %v422
    %926 = vmatmul.bf16.gmra.mxu0 %v877
    %v927 = vpop.f32.mrf.mxu0
    %v928 = vadd.f32 0.0, %v927
    %v929 = vpop.f32.mrf.mxu0
    %930 = vdwg.mxu0
    %v935 = vrot.slane %v889, 2
    %v936 = vrot.slane %v902, 2
    %v937 = vrot.slane %v915, 2
    %v938 = vrot.slane %v928, 2
    %v943 = vadd.f32 %v245, %v935
    %v944 = vadd.f32 %v259, %v936
    %v945 = vadd.f32 %v273, %v937
    %v946 = vadd.f32 %v287, %v938
    %v947 = vxor.u32 %v943, 2147483648
    %v948 = vmul.f32 %v947, 1.442695
    %v949 = vpow.pop %v948
    %v950 = vadd.f32 %v949, 1.0
    %v951 = vrcp.pop %v950
    %v952 = vmul.f32 %v950, %v951
    %v953 = vsub.f32 1.0, %v952
    %v954 = vmul.f32 %v951, %v953
    %v955 = vadd.f32 %v951, %v954
    %vm956 = vweird.f32 %v950
    %vm957 = vweird.f32 %v951
    %vm958 = vmor %vm956, %vm957
    %v959 = vsel %vm958, %v951, %v955
    %v960 = vand.u32 2147483647, %v950
    %vm961 = vcmp.eq.f32.partialorder %v960, 8.507059e+37
    %v962 = vand.u32 %v950, 2147483648
    %v963 = vor.u32 1.1754944e-38, %v962
    %v964 = vsel %vm961, %v963, %v959
    %v965 = vmul.f32 1.0, %v964
    %v966 = vxor.u32 %v944, 2147483648
    %v967 = vmul.f32 %v966, 1.442695
    %v968 = vpow.pop %v967
    %v969 = vadd.f32 %v968, 1.0
    %v970 = vrcp.pop %v969
    %v971 = vmul.f32 %v969, %v970
    %v972 = vsub.f32 1.0, %v971
    %v973 = vmul.f32 %v970, %v972
    %v974 = vadd.f32 %v970, %v973
    %vm975 = vweird.f32 %v969
    %vm976 = vweird.f32 %v970
    %vm977 = vmor %vm975, %vm976
    %v978 = vsel %vm977, %v970, %v974
    %v979 = vand.u32 2147483647, %v969
    %vm980 = vcmp.eq.f32.partialorder %v979, 8.507059e+37
    %v981 = vand.u32 %v969, 2147483648
    %v982 = vor.u32 1.1754944e-38, %v981
    %v983 = vsel %vm980, %v982, %v978
    %v984 = vmul.f32 1.0, %v983
    %v985 = vtanh.pop %v945
    %v986 = vxor.u32 %v946, 2147483648
    %v987 = vmul.f32 %v986, 1.442695
    %v988 = vpow.pop %v987
    %v989 = vadd.f32 %v988, 1.0
    %v990 = vrcp.pop %v989
    %v991 = vmul.f32 %v989, %v990
    %v992 = vsub.f32 1.0, %v991
    %v993 = vmul.f32 %v990, %v992
    %v994 = vadd.f32 %v990, %v993
    %vm995 = vweird.f32 %v989
    %vm996 = vweird.f32 %v990
    %vm997 = vmor %vm995, %vm996
    %v998 = vsel %vm997, %v990, %v994
    %v999 = vand.u32 2147483647, %v989
    %vm1000 = vcmp.eq.f32.partialorder %v999, 8.507059e+37
    %v1001 = vand.u32 %v989, 2147483648
    %v1002 = vor.u32 1.1754944e-38, %v1001
    %v1003 = vsel %vm1000, %v1002, %v998
    %v1004 = vmul.f32 1.0, %v1003
    %v1006 = vrot.slane %v872, 6
    %v1008 = vmul.f32 %v984, %v1006
    %v1009 = vmul.f32 %v965, %v985
    %v1010 = vadd.f32 %v1008, %v1009
    %v1011 = vtanh.pop %v1010
    %v1012 = vmul.f32 %v1004, %v1011
    %v1013 = vpack.c.bf16 %v1012, %v1012
    %v1015 = vrot.slane %v1013, 3
    %1017 = vmatpush.bf16.msra.mxu0 %v447
    %1018 = vmatpush.bf16.msra.mxu0 %v443
    %1019 = vmatpush.bf16.msra.mxu0 %v439
    %1020 = vmatpush.bf16.msra.mxu0 %v435
    %1021 = vmatpush.bf16.msra.mxu0 %v431
    %1022 = vmatpush.bf16.msra.mxu0 %v427
    %1023 = vmatpush.bf16.msra.mxu0 %v423
    %1024 = vmatpush.bf16.msra.mxu0 %v419
    %1025 = vmatmul.bf16.gmra.mxu0 %v1015
    %v1026 = vpop.f32.mrf.mxu0
    %v1027 = vadd.f32 0.0, %v1026
    %v1028 = vpop.f32.mrf.mxu0
    %1029 = vdwg.mxu0
    %1030 = vmatpush.bf16.msra.mxu0 %v448
    %1031 = vmatpush.bf16.msra.mxu0 %v444
    %1032 = vmatpush.bf16.msra.mxu0 %v440
    %1033 = vmatpush.bf16.msra.mxu0 %v436
    %1034 = vmatpush.bf16.msra.mxu0 %v432
    %1035 = vmatpush.bf16.msra.mxu0 %v428
    %1036 = vmatpush.bf16.msra.mxu0 %v424
    %1037 = vmatpush.bf16.msra.mxu0 %v420
    %1038 = vmatmul.bf16.gmra.mxu0 %v1015
    %v1039 = vpop.f32.mrf.mxu0
    %v1040 = vadd.f32 0.0, %v1039
    %v1041 = vpop.f32.mrf.mxu0
    %1042 = vdwg.mxu0
    %1043 = vmatpush.bf16.msra.mxu0 %v449
    %1044 = vmatpush.bf16.msra.mxu0 %v445
    %1045 = vmatpush.bf16.msra.mxu0 %v441
    %1046 = vmatpush.bf16.msra.mxu0 %v437
    %1047 = vmatpush.bf16.msra.mxu0 %v433
    %1048 = vmatpush.bf16.msra.mxu0 %v429
    %1049 = vmatpush.bf16.msra.mxu0 %v425
    %1050 = vmatpush.bf16.msra.mxu0 %v421
    %1051 = vmatmul.bf16.gmra.mxu0 %v1015
    %v1052 = vpop.f32.mrf.mxu0
    %v1053 = vadd.f32 0.0, %v1052
    %v1054 = vpop.f32.mrf.mxu0
    %1055 = vdwg.mxu0
    %1056 = vmatpush.bf16.msra.mxu0 %v450
    %1057 = vmatpush.bf16.msra.mxu0 %v446
    %1058 = vmatpush.bf16.msra.mxu0 %v442
    %1059 = vmatpush.bf16.msra.mxu0 %v438
    %1060 = vmatpush.bf16.msra.mxu0 %v434
    %1061 = vmatpush.bf16.msra.mxu0 %v430
    %1062 = vmatpush.bf16.msra.mxu0 %v426
    %1063 = vmatpush.bf16.msra.mxu0 %v422
    %1064 = vmatmul.bf16.gmra.mxu0 %v1015
    %v1065 = vpop.f32.mrf.mxu0
    %v1066 = vadd.f32 0.0, %v1065
    %v1067 = vpop.f32.mrf.mxu0
    %1068 = vdwg.mxu0
    %v1069 = vadd.f32 %v247, %v1027
    %v1070 = vadd.f32 %v261, %v1040
    %v1071 = vadd.f32 %v275, %v1053
    %v1072 = vadd.f32 %v289, %v1066
    %v1073 = vxor.u32 %v1069, 2147483648
    %v1074 = vmul.f32 %v1073, 1.442695
    %v1075 = vpow.pop %v1074
    %v1076 = vadd.f32 %v1075, 1.0
    %v1077 = vrcp.pop %v1076
    %v1078 = vmul.f32 %v1076, %v1077
    %v1079 = vsub.f32 1.0, %v1078
    %v1080 = vmul.f32 %v1077, %v1079
    %v1081 = vadd.f32 %v1077, %v1080
    %vm1082 = vweird.f32 %v1076
    %vm1083 = vweird.f32 %v1077
    %vm1084 = vmor %vm1082, %vm1083
    %v1085 = vsel %vm1084, %v1077, %v1081
    %v1086 = vand.u32 2147483647, %v1076
    %vm1087 = vcmp.eq.f32.partialorder %v1086, 8.507059e+37
    %v1088 = vand.u32 %v1076, 2147483648
    %v1089 = vor.u32 1.1754944e-38, %v1088
    %v1090 = vsel %vm1087, %v1089, %v1085
    %v1091 = vmul.f32 1.0, %v1090
    %v1092 = vxor.u32 %v1070, 2147483648
    %v1093 = vmul.f32 %v1092, 1.442695
    %v1094 = vpow.pop %v1093
    %v1095 = vadd.f32 %v1094, 1.0
    %v1096 = vrcp.pop %v1095
    %v1097 = vmul.f32 %v1095, %v1096
    %v1098 = vsub.f32 1.0, %v1097
    %v1099 = vmul.f32 %v1096, %v1098
    %v1100 = vadd.f32 %v1096, %v1099
    %vm1101 = vweird.f32 %v1095
    %vm1102 = vweird.f32 %v1096
    %vm1103 = vmor %vm1101, %vm1102
    %v1104 = vsel %vm1103, %v1096, %v1100
    %v1105 = vand.u32 2147483647, %v1095
    %vm1106 = vcmp.eq.f32.partialorder %v1105, 8.507059e+37
    %v1107 = vand.u32 %v1095, 2147483648
    %v1108 = vor.u32 1.1754944e-38, %v1107
    %v1109 = vsel %vm1106, %v1108, %v1104
    %v1110 = vmul.f32 1.0, %v1109
    %v1111 = vtanh.pop %v1071
    %v1112 = vxor.u32 %v1072, 2147483648
    %v1113 = vmul.f32 %v1112, 1.442695
    %v1114 = vpow.pop %v1113
    %v1115 = vadd.f32 %v1114, 1.0
    %v1116 = vrcp.pop %v1115
    %v1117 = vmul.f32 %v1115, %v1116
    %v1118 = vsub.f32 1.0, %v1117
    %v1119 = vmul.f32 %v1116, %v1118
    %v1120 = vadd.f32 %v1116, %v1119
    %vm1121 = vweird.f32 %v1115
    %vm1122 = vweird.f32 %v1116
    %vm1123 = vmor %vm1121, %vm1122
    %v1124 = vsel %vm1123, %v1116, %v1120
    %v1125 = vand.u32 2147483647, %v1115
    %vm1126 = vcmp.eq.f32.partialorder %v1125, 8.507059e+37
    %v1127 = vand.u32 %v1115, 2147483648
    %v1128 = vor.u32 1.1754944e-38, %v1127
    %v1129 = vsel %vm1126, %v1128, %v1124
    %v1130 = vmul.f32 1.0, %v1129
    %v1132 = vrot.slane %v1010, 6
    %v1134 = vmul.f32 %v1110, %v1132
    %v1135 = vmul.f32 %v1091, %v1111
    %v1136 = vadd.f32 %v1134, %v1135
    %v1137 = vtanh.pop %v1136
    %v1138 = vmul.f32 %v1130, %v1137
    %v1139 = vpack.c.bf16 %v1138, %v1138
    %1140 = vmatpush.bf16.msra.mxu0 %v447
    %1141 = vmatpush.bf16.msra.mxu0 %v443
    %1142 = vmatpush.bf16.msra.mxu0 %v439
    %1143 = vmatpush.bf16.msra.mxu0 %v435
    %1144 = vmatpush.bf16.msra.mxu0 %v431
    %1145 = vmatpush.bf16.msra.mxu0 %v427
    %1146 = vmatpush.bf16.msra.mxu0 %v423
    %1147 = vmatpush.bf16.msra.mxu0 %v419
    %1148 = vmatmul.bf16.gmra.mxu0 %v1139
    %v1149 = vpop.f32.mrf.mxu0
    %v1150 = vadd.f32 0.0, %v1149
    %v1151 = vpop.f32.mrf.mxu0
    %1152 = vdwg.mxu0
    %1153 = vmatpush.bf16.msra.mxu0 %v448
    %1154 = vmatpush.bf16.msra.mxu0 %v444
    %1155 = vmatpush.bf16.msra.mxu0 %v440
    %1156 = vmatpush.bf16.msra.mxu0 %v436
    %1157 = vmatpush.bf16.msra.mxu0 %v432
    %1158 = vmatpush.bf16.msra.mxu0 %v428
    %1159 = vmatpush.bf16.msra.mxu0 %v424
    %1160 = vmatpush.bf16.msra.mxu0 %v420
    %1161 = vmatmul.bf16.gmra.mxu0 %v1139
    %v1162 = vpop.f32.mrf.mxu0
    %v1163 = vadd.f32 0.0, %v1162
    %v1164 = vpop.f32.mrf.mxu0
    %1165 = vdwg.mxu0
    %1166 = vmatpush.bf16.msra.mxu0 %v449
    %1167 = vmatpush.bf16.msra.mxu0 %v445
    %1168 = vmatpush.bf16.msra.mxu0 %v441
    %1169 = vmatpush.bf16.msra.mxu0 %v437
    %1170 = vmatpush.bf16.msra.mxu0 %v433
    %1171 = vmatpush.bf16.msra.mxu0 %v429
    %1172 = vmatpush.bf16.msra.mxu0 %v425
    %1173 = vmatpush.bf16.msra.mxu0 %v421
    %1174 = vmatmul.bf16.gmra.mxu0 %v1139
    %v1175 = vpop.f32.mrf.mxu0
    %v1176 = vadd.f32 0.0, %v1175
    %v1177 = vpop.f32.mrf.mxu0
    %1178 = vdwg.mxu0
    %1179 = vmatpush.bf16.msra.mxu0 %v450
    %1180 = vmatpush.bf16.msra.mxu0 %v446
    %1181 = vmatpush.bf16.msra.mxu0 %v442
    %1182 = vmatpush.bf16.msra.mxu0 %v438
    %1183 = vmatpush.bf16.msra.mxu0 %v434
    %1184 = vmatpush.bf16.msra.mxu0 %v430
    %1185 = vmatpush.bf16.msra.mxu0 %v426
    %1186 = vmatpush.bf16.msra.mxu0 %v422
    %1187 = vmatmul.bf16.gmra.mxu0 %v1139
    %v1188 = vpop.f32.mrf.mxu0
    %v1189 = vadd.f32 0.0, %v1188
    %v1190 = vpop.f32.mrf.mxu0
    %1191 = vdwg.mxu0
    %v1196 = vrot.slane %v1150, 6
    %v1197 = vrot.slane %v1163, 6
    %v1198 = vrot.slane %v1176, 6
    %v1199 = vrot.slane %v1189, 6
    %v1204 = vadd.f32 %v247, %v1196
    %v1205 = vadd.f32 %v261, %v1197
    %v1206 = vadd.f32 %v275, %v1198
    %v1207 = vadd.f32 %v289, %v1199
    %v1208 = vxor.u32 %v1204, 2147483648
    %v1209 = vmul.f32 %v1208, 1.442695
    %v1210 = vpow.pop %v1209
    %v1211 = vadd.f32 %v1210, 1.0
    %v1212 = vrcp.pop %v1211
    %v1213 = vmul.f32 %v1211, %v1212
    %v1214 = vsub.f32 1.0, %v1213
    %v1215 = vmul.f32 %v1212, %v1214
    %v1216 = vadd.f32 %v1212, %v1215
    %vm1217 = vweird.f32 %v1211
    %vm1218 = vweird.f32 %v1212
    %vm1219 = vmor %vm1217, %vm1218
    %v1220 = vsel %vm1219, %v1212, %v1216
    %v1221 = vand.u32 2147483647, %v1211
    %vm1222 = vcmp.eq.f32.partialorder %v1221, 8.507059e+37
    %v1223 = vand.u32 %v1211, 2147483648
    %v1224 = vor.u32 1.1754944e-38, %v1223
    %v1225 = vsel %vm1222, %v1224, %v1220
    %v1226 = vmul.f32 1.0, %v1225
    %v1227 = vxor.u32 %v1205, 2147483648
    %v1228 = vmul.f32 %v1227, 1.442695
    %v1229 = vpow.pop %v1228
    %v1230 = vadd.f32 %v1229, 1.0
    %v1231 = vrcp.pop %v1230
    %v1232 = vmul.f32 %v1230, %v1231
    %v1233 = vsub.f32 1.0, %v1232
    %v1234 = vmul.f32 %v1231, %v1233
    %v1235 = vadd.f32 %v1231, %v1234
    %vm1236 = vweird.f32 %v1230
    %vm1237 = vweird.f32 %v1231
    %vm1238 = vmor %vm1236, %vm1237
    %v1239 = vsel %vm1238, %v1231, %v1235
    %v1240 = vand.u32 2147483647, %v1230
    %vm1241 = vcmp.eq.f32.partialorder %v1240, 8.507059e+37
    %v1242 = vand.u32 %v1230, 2147483648
    %v1243 = vor.u32 1.1754944e-38, %v1242
    %v1244 = vsel %vm1241, %v1243, %v1239
    %v1245 = vmul.f32 1.0, %v1244
    %v1246 = vtanh.pop %v1206
    %v1247 = vxor.u32 %v1207, 2147483648
    %v1248 = vmul.f32 %v1247, 1.442695
    %v1249 = vpow.pop %v1248
    %v1250 = vadd.f32 %v1249, 1.0
    %v1251 = vrcp.pop %v1250
    %v1252 = vmul.f32 %v1250, %v1251
    %v1253 = vsub.f32 1.0, %v1252
    %v1254 = vmul.f32 %v1251, %v1253
    %v1255 = vadd.f32 %v1251, %v1254
    %vm1256 = vweird.f32 %v1250
    %vm1257 = vweird.f32 %v1251
    %vm1258 = vmor %vm1256, %vm1257
    %v1259 = vsel %vm1258, %v1251, %v1255
    %v1260 = vand.u32 2147483647, %v1250
    %vm1261 = vcmp.eq.f32.partialorder %v1260, 8.507059e+37
    %v1262 = vand.u32 %v1250, 2147483648
    %v1263 = vor.u32 1.1754944e-38, %v1262
    %v1264 = vsel %vm1261, %v1263, %v1259
    %v1265 = vmul.f32 1.0, %v1264
    %v1267 = vrot.slane %v1136, 6
    %v1269 = vmul.f32 %v1245, %v1267
    %v1270 = vmul.f32 %v1226, %v1246
    %v1271 = vadd.f32 %v1269, %v1270
    %v1272 = vtanh.pop %v1271
    %v1273 = vmul.f32 %v1265, %v1272
    %v1274 = vpack.c.bf16 %v1273, %v1273
    %v1276 = vrot.slane %v1274, 1
    %1278 = vmatpush.bf16.msra.mxu0 %v447
    %1279 = vmatpush.bf16.msra.mxu0 %v443
    %1280 = vmatpush.bf16.msra.mxu0 %v439
    %1281 = vmatpush.bf16.msra.mxu0 %v435
    %1282 = vmatpush.bf16.msra.mxu0 %v431
    %1283 = vmatpush.bf16.msra.mxu0 %v427
    %1284 = vmatpush.bf16.msra.mxu0 %v423
    %1285 = vmatpush.bf16.msra.mxu0 %v419
    %1286 = vmatmul.bf16.gmra.mxu0 %v1276
    %v1287 = vpop.f32.mrf.mxu0
    %v1288 = vadd.f32 0.0, %v1287
    %v1289 = vpop.f32.mrf.mxu0
    %1290 = vdwg.mxu0
    %1291 = vmatpush.bf16.msra.mxu0 %v448
    %1292 = vmatpush.bf16.msra.mxu0 %v444
    %1293 = vmatpush.bf16.msra.mxu0 %v440
    %1294 = vmatpush.bf16.msra.mxu0 %v436
    %1295 = vmatpush.bf16.msra.mxu0 %v432
    %1296 = vmatpush.bf16.msra.mxu0 %v428
    %1297 = vmatpush.bf16.msra.mxu0 %v424
    %1298 = vmatpush.bf16.msra.mxu0 %v420
    %1299 = vmatmul.bf16.gmra.mxu0 %v1276
    %v1300 = vpop.f32.mrf.mxu0
    %v1301 = vadd.f32 0.0, %v1300
    %v1302 = vpop.f32.mrf.mxu0
    %1303 = vdwg.mxu0
    %1304 = vmatpush.bf16.msra.mxu0 %v449
    %1305 = vmatpush.bf16.msra.mxu0 %v445
    %1306 = vmatpush.bf16.msra.mxu0 %v441
    %1307 = vmatpush.bf16.msra.mxu0 %v437
    %1308 = vmatpush.bf16.msra.mxu0 %v433
    %1309 = vmatpush.bf16.msra.mxu0 %v429
    %1310 = vmatpush.bf16.msra.mxu0 %v425
    %1311 = vmatpush.bf16.msra.mxu0 %v421
    %1312 = vmatmul.bf16.gmra.mxu0 %v1276
    %v1313 = vpop.f32.mrf.mxu0
    %v1314 = vadd.f32 0.0, %v1313
    %v1315 = vpop.f32.mrf.mxu0
    %1316 = vdwg.mxu0
    %1317 = vmatpush.bf16.msra.mxu0 %v450
    %1318 = vmatpush.bf16.msra.mxu0 %v446
    %1319 = vmatpush.bf16.msra.mxu0 %v442
    %1320 = vmatpush.bf16.msra.mxu0 %v438
    %1321 = vmatpush.bf16.msra.mxu0 %v434
    %1322 = vmatpush.bf16.msra.mxu0 %v430
    %1323 = vmatpush.bf16.msra.mxu0 %v426
    %1324 = vmatpush.bf16.msra.mxu0 %v422
    %1325 = vmatmul.bf16.gmra.mxu0 %v1276
    %v1326 = vpop.f32.mrf.mxu0
    %v1327 = vadd.f32 0.0, %v1326
    %v1328 = vpop.f32.mrf.mxu0
    %1329 = vdwg.mxu0
    %v1334 = vrot.slane %v1288, 4
    %v1335 = vrot.slane %v1301, 4
    %v1336 = vrot.slane %v1314, 4
    %v1337 = vrot.slane %v1327, 4
    %v1342 = vadd.f32 %v247, %v1334
    %v1343 = vadd.f32 %v261, %v1335
    %v1344 = vadd.f32 %v275, %v1336
    %v1345 = vadd.f32 %v289, %v1337
    %v1346 = vxor.u32 %v1342, 2147483648
    %v1347 = vmul.f32 %v1346, 1.442695
    %v1348 = vpow.pop %v1347
    %v1349 = vadd.f32 %v1348, 1.0
    %v1350 = vrcp.pop %v1349
    %v1351 = vmul.f32 %v1349, %v1350
    %v1352 = vsub.f32 1.0, %v1351
    %v1353 = vmul.f32 %v1350, %v1352
    %v1354 = vadd.f32 %v1350, %v1353
    %vm1355 = vweird.f32 %v1349
    %vm1356 = vweird.f32 %v1350
    %vm1357 = vmor %vm1355, %vm1356
    %v1358 = vsel %vm1357, %v1350, %v1354
    %v1359 = vand.u32 2147483647, %v1349
    %vm1360 = vcmp.eq.f32.partialorder %v1359, 8.507059e+37
    %v1361 = vand.u32 %v1349, 2147483648
    %v1362 = vor.u32 1.1754944e-38, %v1361
    %v1363 = vsel %vm1360, %v1362, %v1358
    %v1364 = vmul.f32 1.0, %v1363
    %v1365 = vxor.u32 %v1343, 2147483648
    %v1366 = vmul.f32 %v1365, 1.442695
    %v1367 = vpow.pop %v1366
    %v1368 = vadd.f32 %v1367, 1.0
    %v1369 = vrcp.pop %v1368
    %v1370 = vmul.f32 %v1368, %v1369
    %v1371 = vsub.f32 1.0, %v1370
    %v1372 = vmul.f32 %v1369, %v1371
    %v1373 = vadd.f32 %v1369, %v1372
    %vm1374 = vweird.f32 %v1368
    %vm1375 = vweird.f32 %v1369
    %vm1376 = vmor %vm1374, %vm1375
    %v1377 = vsel %vm1376, %v1369, %v1373
    %v1378 = vand.u32 2147483647, %v1368
    %vm1379 = vcmp.eq.f32.partialorder %v1378, 8.507059e+37
    %v1380 = vand.u32 %v1368, 2147483648
    %v1381 = vor.u32 1.1754944e-38, %v1380
    %v1382 = vsel %vm1379, %v1381, %v1377
    %v1383 = vmul.f32 1.0, %v1382
    %v1384 = vtanh.pop %v1344
    %v1385 = vxor.u32 %v1345, 2147483648
    %v1386 = vmul.f32 %v1385, 1.442695
    %v1387 = vpow.pop %v1386
    %v1388 = vadd.f32 %v1387, 1.0
    %v1389 = vrcp.pop %v1388
    %v1390 = vmul.f32 %v1388, %v1389
    %v1391 = vsub.f32 1.0, %v1390
    %v1392 = vmul.f32 %v1389, %v1391
    %v1393 = vadd.f32 %v1389, %v1392
    %vm1394 = vweird.f32 %v1388
    %vm1395 = vweird.f32 %v1389
    %vm1396 = vmor %vm1394, %vm1395
    %v1397 = vsel %vm1396, %v1389, %v1393
    %v1398 = vand.u32 2147483647, %v1388
    %vm1399 = vcmp.eq.f32.partialorder %v1398, 8.507059e+37
    %v1400 = vand.u32 %v1388, 2147483648
    %v1401 = vor.u32 1.1754944e-38, %v1400
    %v1402 = vsel %vm1399, %v1401, %v1397
    %v1403 = vmul.f32 1.0, %v1402
    %v1405 = vrot.slane %v1271, 6
    %v1407 = vmul.f32 %v1383, %v1405
    %v1408 = vmul.f32 %v1364, %v1384
    %v1409 = vadd.f32 %v1407, %v1408
    %v1410 = vtanh.pop %v1409
    %v1411 = vmul.f32 %v1403, %v1410
    %v1412 = vpack.c.bf16 %v1411, %v1411
    %v1414 = vrot.slane %v1412, 2
    %1416 = vmatpush.bf16.msra.mxu0 %v447
    %1417 = vmatpush.bf16.msra.mxu0 %v443
    %1418 = vmatpush.bf16.msra.mxu0 %v439
    %1419 = vmatpush.bf16.msra.mxu0 %v435
    %1420 = vmatpush.bf16.msra.mxu0 %v431
    %1421 = vmatpush.bf16.msra.mxu0 %v427
    %1422 = vmatpush.bf16.msra.mxu0 %v423
    %1423 = vmatpush.bf16.msra.mxu0 %v419
    %1424 = vmatmul.bf16.gmra.mxu0 %v1414
    %v1425 = vpop.f32.mrf.mxu0
    %v1426 = vadd.f32 0.0, %v1425
    %v1427 = vpop.f32.mrf.mxu0
    %1428 = vdwg.mxu0
    %1429 = vmatpush.bf16.msra.mxu0 %v448
    %1430 = vmatpush.bf16.msra.mxu0 %v444
    %1431 = vmatpush.bf16.msra.mxu0 %v440
    %1432 = vmatpush.bf16.msra.mxu0 %v436
    %1433 = vmatpush.bf16.msra.mxu0 %v432
    %1434 = vmatpush.bf16.msra.mxu0 %v428
    %1435 = vmatpush.bf16.msra.mxu0 %v424
    %1436 = vmatpush.bf16.msra.mxu0 %v420
    %1437 = vmatmul.bf16.gmra.mxu0 %v1414
    %v1438 = vpop.f32.mrf.mxu0
    %v1439 = vadd.f32 0.0, %v1438
    %v1440 = vpop.f32.mrf.mxu0
    %1441 = vdwg.mxu0
    %1442 = vmatpush.bf16.msra.mxu0 %v449
    %1443 = vmatpush.bf16.msra.mxu0 %v445
    %1444 = vmatpush.bf16.msra.mxu0 %v441
    %1445 = vmatpush.bf16.msra.mxu0 %v437
    %1446 = vmatpush.bf16.msra.mxu0 %v433
    %1447 = vmatpush.bf16.msra.mxu0 %v429
    %1448 = vmatpush.bf16.msra.mxu0 %v425
    %1449 = vmatpush.bf16.msra.mxu0 %v421
    %1450 = vmatmul.bf16.gmra.mxu0 %v1414
    %v1451 = vpop.f32.mrf.mxu0
    %v1452 = vadd.f32 0.0, %v1451
    %v1453 = vpop.f32.mrf.mxu0
    %1454 = vdwg.mxu0
    %1455 = vmatpush.bf16.msra.mxu0 %v450
    %1456 = vmatpush.bf16.msra.mxu0 %v446
    %1457 = vmatpush.bf16.msra.mxu0 %v442
    %1458 = vmatpush.bf16.msra.mxu0 %v438
    %1459 = vmatpush.bf16.msra.mxu0 %v434
    %1460 = vmatpush.bf16.msra.mxu0 %v430
    %1461 = vmatpush.bf16.msra.mxu0 %v426
    %1462 = vmatpush.bf16.msra.mxu0 %v422
    %1463 = vmatmul.bf16.gmra.mxu0 %v1414
    %v1464 = vpop.f32.mrf.mxu0
    %v1465 = vadd.f32 0.0, %v1464
    %v1466 = vpop.f32.mrf.mxu0
    %1467 = vdwg.mxu0
    %v1472 = vrot.slane %v1426, 2
    %v1473 = vrot.slane %v1439, 2
    %v1474 = vrot.slane %v1452, 2
    %v1475 = vrot.slane %v1465, 2
    %v1480 = vadd.f32 %v247, %v1472
    %v1481 = vadd.f32 %v261, %v1473
    %v1482 = vadd.f32 %v275, %v1474
    %v1483 = vadd.f32 %v289, %v1475
    %v1484 = vxor.u32 %v1480, 2147483648
    %v1485 = vmul.f32 %v1484, 1.442695
    %v1486 = vpow.pop %v1485
    %v1487 = vadd.f32 %v1486, 1.0
    %v1488 = vrcp.pop %v1487
    %v1489 = vmul.f32 %v1487, %v1488
    %v1490 = vsub.f32 1.0, %v1489
    %v1491 = vmul.f32 %v1488, %v1490
    %v1492 = vadd.f32 %v1488, %v1491
    %vm1493 = vweird.f32 %v1487
    %vm1494 = vweird.f32 %v1488
    %vm1495 = vmor %vm1493, %vm1494
    %v1496 = vsel %vm1495, %v1488, %v1492
    %v1497 = vand.u32 2147483647, %v1487
    %vm1498 = vcmp.eq.f32.partialorder %v1497, 8.507059e+37
    %v1499 = vand.u32 %v1487, 2147483648
    %v1500 = vor.u32 1.1754944e-38, %v1499
    %v1501 = vsel %vm1498, %v1500, %v1496
    %v1502 = vmul.f32 1.0, %v1501
    %v1503 = vxor.u32 %v1481, 2147483648
    %v1504 = vmul.f32 %v1503, 1.442695
    %v1505 = vpow.pop %v1504
    %v1506 = vadd.f32 %v1505, 1.0
    %v1507 = vrcp.pop %v1506
    %v1508 = vmul.f32 %v1506, %v1507
    %v1509 = vsub.f32 1.0, %v1508
    %v1510 = vmul.f32 %v1507, %v1509
    %v1511 = vadd.f32 %v1507, %v1510
    %vm1512 = vweird.f32 %v1506
    %vm1513 = vweird.f32 %v1507
    %vm1514 = vmor %vm1512, %vm1513
    %v1515 = vsel %vm1514, %v1507, %v1511
    %v1516 = vand.u32 2147483647, %v1506
    %vm1517 = vcmp.eq.f32.partialorder %v1516, 8.507059e+37
    %v1518 = vand.u32 %v1506, 2147483648
    %v1519 = vor.u32 1.1754944e-38, %v1518
    %v1520 = vsel %vm1517, %v1519, %v1515
    %v1521 = vmul.f32 1.0, %v1520
    %v1522 = vtanh.pop %v1482
    %v1523 = vxor.u32 %v1483, 2147483648
    %v1524 = vmul.f32 %v1523, 1.442695
    %v1525 = vpow.pop %v1524
    %v1526 = vadd.f32 %v1525, 1.0
    %v1527 = vrcp.pop %v1526
    %v1528 = vmul.f32 %v1526, %v1527
    %v1529 = vsub.f32 1.0, %v1528
    %v1530 = vmul.f32 %v1527, %v1529
    %v1531 = vadd.f32 %v1527, %v1530
    %vm1532 = vweird.f32 %v1526
    %vm1533 = vweird.f32 %v1527
    %vm1534 = vmor %vm1532, %vm1533
    %v1535 = vsel %vm1534, %v1527, %v1531
    %v1536 = vand.u32 2147483647, %v1526
    %vm1537 = vcmp.eq.f32.partialorder %v1536, 8.507059e+37
    %v1538 = vand.u32 %v1526, 2147483648
    %v1539 = vor.u32 1.1754944e-38, %v1538
    %v1540 = vsel %vm1537, %v1539, %v1535
    %v1541 = vmul.f32 1.0, %v1540
    %v1543 = vrot.slane %v1409, 6
    %v1545 = vmul.f32 %v1521, %v1543
    %v1546 = vmul.f32 %v1502, %v1522
    %v1547 = vadd.f32 %v1545, %v1546
    %v1548 = vtanh.pop %v1547
    %v1549 = vmul.f32 %v1541, %v1548
    %v1551 = vrot.slane %v736, 1
    %v1554 = vrot.slane %v874, 2
    %v1557 = vrot.slane %v1012, 3
    %v1560 = vrot.slane %v1138, 4
    %v1563 = vrot.slane %v1273, 5
    %v1566 = vrot.slane %v1411, 6
    %v1569 = vrot.slane %v1549, 7
    %v1572 = vrot.slane %v601, 1
    %v1574 = vrot.slane %v736, 2
    %v1576 = vrot.slane %v874, 3
    %v1578 = vrot.slane %v1012, 4
    %v1580 = vrot.slane %v1138, 5
    %v1582 = vrot.slane %v1273, 6
    %v1584 = vrot.slane %v1411, 7
    %v1586 = vsel %vm222, %v601, %v1551
    %vm1587 = vcmask 1041408
    %v1588 = vsel %vm1587, %v1586, %v1554
    %vm1589 = vcmask 1042432
    %v1590 = vsel %vm1589, %v1588, %v1557
    %vm1591 = vcmask 1043456
    %v1592 = vsel %vm1591, %v1590, %v1560
    %vm1593 = vcmask 1044480
    %v1594 = vsel %vm1593, %v1592, %v1563
    %vm1595 = vcmask 1045504
    %v1596 = vsel %vm1595, %v1594, %v1566
    %vm1597 = vcmask 1046528
    %v1598 = vsel %vm1597, %v1596, %v1569
    %v1599 = vsel %vm222, %v1572, %v1574
    %v1600 = vsel %vm1587, %v1599, %v1576
    %v1601 = vsel %vm1589, %v1600, %v1578
    %v1602 = vsel %vm1591, %v1601, %v1580
    %v1603 = vsel %vm1593, %v1602, %v1582
    %v1604 = vsel %vm1595, %v1603, %v1584
    %v1605 = vsel %vm1597, %v1604, %v1549
    %v1606 = vpack.c.bf16 %v1605, %v1598
    %v1607 = vld [vmem:[#allocation6] sm:$0xf]
    %v1608 = vld [vmem:[#allocation6 + $0x4] sm:$0xf]
    %v1609 = vld [vmem:[#allocation6 + $0x8] sm:$0xf]
    %v1610 = vld [vmem:[#allocation6 + $0xc] sm:$0xf]
    %v1611 = vld [vmem:[#allocation6 + $0x10] sm:$0xf]
    %v1612 = vld [vmem:[#allocation6 + $0x14] sm:$0xf]
    %v1613 = vld [vmem:[#allocation6 + $0x18] sm:$0xf]
    %v1614 = vld [vmem:[#allocation6 + $0x1c] sm:$0xf]
    %v1615 = vld [vmem:[#allocation6 + $0x20] sm:$0xf]
    %v1616 = vld [vmem:[#allocation6 + $0x24] sm:$0xf]
    %v1617 = vld [vmem:[#allocation6 + $0x28] sm:$0xf]
    %v1618 = vld [vmem:[#allocation6 + $0x2c] sm:$0xf]
    %v1619 = vld [vmem:[#allocation6 + $0x30] sm:$0xf]
    %v1620 = vld [vmem:[#allocation6 + $0x34] sm:$0xf]
    %v1621 = vld [vmem:[#allocation6 + $0x38] sm:$0xf]
    %v1622 = vld [vmem:[#allocation6 + $0x3c] sm:$0xf]
    %v1623 = vld [vmem:[%s6] sm:$0x1]
    %v1625 = vperm.slane %v1623, 0
    %v1643 = vunpack.c.l.b16 %v1607
    %v1644 = vunpack.c.l.b16 %v1608
    %v1645 = vunpack.c.l.b16 %v1609
    %v1646 = vunpack.c.l.b16 %v1610
    %v1647 = vunpack.c.l.b16 %v1611
    %v1648 = vunpack.c.l.b16 %v1612
    %v1649 = vunpack.c.l.b16 %v1613
    %v1650 = vunpack.c.l.b16 %v1614
    %v1651 = vunpack.c.l.b16 %v1615
    %v1652 = vunpack.c.l.b16 %v1616
    %v1653 = vunpack.c.l.b16 %v1617
    %v1654 = vunpack.c.l.b16 %v1618
    %v1655 = vunpack.c.l.b16 %v1619
    %v1656 = vunpack.c.l.b16 %v1620
    %v1657 = vunpack.c.l.b16 %v1621
    %v1658 = vunpack.c.l.b16 %v1622
    %v1659 = vpack.c.b16 %v1644, %v1643
    %v1660 = vpack.c.b16 %v1646, %v1645
    %v1661 = vpack.c.b16 %v1648, %v1647
    %v1662 = vpack.c.b16 %v1650, %v1649
    %v1663 = vpack.c.b16 %v1652, %v1651
    %v1664 = vpack.c.b16 %v1654, %v1653
    %v1665 = vpack.c.b16 %v1656, %v1655
    %v1666 = vpack.c.b16 %v1658, %v1657
    %1675 = vmatpush.bf16.msra.mxu0 %v1666
    %1676 = vmatpush.bf16.msra.mxu0 %v1665
    %1677 = vmatpush.bf16.msra.mxu0 %v1664
    %1678 = vmatpush.bf16.msra.mxu0 %v1663
    %1679 = vmatpush.bf16.msra.mxu0 %v1662
    %1680 = vmatpush.bf16.msra.mxu0 %v1661
    %1681 = vmatpush.bf16.msra.mxu0 %v1660
    %1682 = vmatpush.bf16.msra.mxu0 %v1659
    %1683 = vmatmul.bf16.gmra.mxu0 %v1606
    %v1684 = vpop.f32.mrf.mxu0
    %v1685 = vadd.f32 %v1625, %v1684
    %v1686 = vpop.f32.mrf.mxu0
    %v1687 = vadd.f32 %v1625, %v1686
    %1688 = vdwg.mxu0
    %vm1689 = vcmp.lt.s32.totalorder %v77, 5
    %v1690 = vsel %vm1689, %v1685, -1e+30
    %v1691 = vsel %vm1689, %v1687, -1e+30
    %1692 = vmax.xlane.f32.xlu0 %v1690
    %v1693 = vpop.xlane.xlu0 %1692
    %1694 = vmax.xlane.f32.xlu0 %v1691
    %v1695 = vpop.xlane.xlu0 %1694
    %v1696 = vsub.f32 %v1690, %v1693
    %v1697 = vsub.f32 %v1691, %v1695
    %v1698 = vmul.f32 %v1696, 1.442695
    %v1699 = vpow.pop %v1698
    %v1700 = vmul.f32 %v1697, 1.442695
    %v1701 = vpow.pop %v1700
    %1702 = vadd.xlane.f32.xlu0 %v1699
    %v1703 = vpop.xlane.xlu0 %1702
    %1704 = vadd.xlane.f32.xlu0 %v1701
    %v1705 = vpop.xlane.xlu0 %1704
    %v1706 = vlog2.pop %v1703
    %v1707 = vmul.f32 %v1706, 0.6931472
    %v1708 = vlog2.pop %v1705
    %v1709 = vmul.f32 %v1708, 0.6931472
    %v1710 = vadd.f32 %v1693, %v1707
    %v1711 = vadd.f32 %v1695, %v1709
    %v1712 = vsub.f32 %v1690, %v1710
    %v1713 = vsub.f32 %v1691, %v1711
    %1714 = vst [vmem:[%s7] sm:$0xff] %v1712
    %1715 = vst [vmem:[%s7 + $0x8] sm:$0xff] %v1713
    // Predicated region
    $region42: #{net_forward.1} parent=1 // pred_check
      _
    $region43: #{net_forward.1} parent=1 // pred_check_branch
      %1717 = sbr.rel (0) target = $region45
    $region44: #{net_forward.1} parent=1 // pred_region
      _
    $region45: #{net_forward.1} parent=1 // pred_fallthru
      _
    // Predicated region
    $region46: #{net_forward.1} parent=1 // pred_check
      _
    $region47: #{net_forward.1} parent=1 // pred_check_branch
      %1719 = sbr.rel (0) target = $region49
    $region48: #{net_forward.1} parent=1 // pred_region
      _
    $region49: #{net_forward.1} parent=1 // pred_fallthru
      _
    %1720 = vsyncpa [#allocation3], 1
    %1721 = vsyncpa [#allocation5], 1

</llo_original>
